<compile_context>
chip_gen: v7x
topology: tpu7x:2x2x1
jax: 0.10.0
libtpu: 0.0.40
codegen_flags: <defaults>
</compile_context>

<pallas_src>
import math
import functools

import jax
import jax.numpy as jnp
from jax.experimental import pallas as pl
from jax.experimental.pallas import tpu as pltpu

_EPS = 1e-6


def _layer_norm(v, g, b):
    mu = jnp.mean(v, axis=-1, keepdims=True)
    var = jnp.mean((v - mu) ** 2, axis=-1, keepdims=True)
    return (v - mu) * jax.lax.rsqrt(var + _EPS) * g + b


# ---------------------------------------------------------------------------
# Kernel 1: x LayerNorm + K/V projection (one pass over x, bf16 outputs).
# ---------------------------------------------------------------------------
def kv_proj_kernel(x_ref, gx_ref, bx_ref, wk_ref, bk_ref, wv_ref, bv_ref,
                   k_ref, v_ref):
    f32 = jnp.float32
    x = x_ref[0].astype(f32)                                       # (TKV, D)
    xn = _layer_norm(x, gx_ref[...], bx_ref[...]).astype(jnp.bfloat16)
    k = jnp.dot(xn, wk_ref[...], preferred_element_type=f32) + bk_ref[...]
    v = jnp.dot(xn, wv_ref[...], preferred_element_type=f32) + bv_ref[...]
    k_ref[0] = k.astype(k_ref.dtype)
    v_ref[0] = v.astype(v_ref.dtype)


# ---------------------------------------------------------------------------
# Kernel 2: y LayerNorm -> MHA (K/V precomputed) -> residual -> pre-LN FFN
#           (chunked over the FF dimension) -> residual.
# ---------------------------------------------------------------------------
def fusion_attn_ffn_kernel(
        y_ref, mask_ref, k_ref, v_ref,
        gy_ref, by_ref, wq_ref, bq_ref, wo_ref, bo_ref,
        gf_ref, bf_ref, w1_ref, b1_ref, w2_ref, b2_ref,
        o_ref,
        acc_scr, hres_scr, hn_scr,
        *, num_heads, head_size):
    f32 = jnp.float32
    bf16 = jnp.bfloat16
    nf = pl.program_id(2)

    @pl.when(nf == 0)
    def _attention():
        y = y_ref[0].astype(f32)                                   # (TQ, D)
        yn = _layer_norm(y, gy_ref[...], by_ref[...]).astype(bf16)
        scale = 1.0 / math.sqrt(head_size)
        q = (jnp.dot(yn, wq_ref[...], preferred_element_type=f32)
             + bq_ref[...]) * scale                                # scaled once, full width
        q = q.astype(bf16)

        # Finite additive mask bias shared by all heads.  bf16 keeps the f32
        # exponent range so -1e30 is representable; fully-masked rows degrade
        # to uniform attention (NaN-free), matching the -inf+softmax reference.
        bias = jnp.where(mask_ref[0] != 0, 0.0, -1e30).astype(bf16)  # (TQ, Skv)

        k_all = k_ref[0]                                           # (Skv, D) bf16
        v_all = v_ref[0]                                           # (Skv, D) bf16
        wo = wo_ref[...]                                           # (D, D)  bf16
        qkt_dims = (((1,), (1,)), ((), ()))                        # q @ k^T (contract hd)

        if head_size % 128 == 0:
            # Lane-aligned column stores: per-head context into bf16 scratch,
            # then ONE full-K output projection (fills the 256-wide MXU).
            for h in range(num_heads):
                sl = slice(h * head_size, (h + 1) * head_size)
                s = jax.lax.dot_general(q[:, sl], k_all[:, sl], qkt_dims,
                                        preferred_element_type=f32) + bias
                s = s - jnp.max(s, axis=-1, keepdims=True)
                e = jnp.exp(s)
                p = (e * pl.reciprocal(jnp.sum(e, axis=-1, keepdims=True),
                                       approx=True)).astype(bf16)
                hn_scr[:, sl] = jnp.dot(p, v_all[:, sl],
                                        preferred_element_type=f32).astype(bf16)
            att = jnp.dot(hn_scr[...], wo, preferred_element_type=f32)
            h_res = att + bo_ref[...] + y
        else:
            # head_size < 128: fold each head straight into the output
            # projection, accumulating in a (TQ, D) f32 VMEM scratch
            # (bounds vreg liveness / spill across the unrolled head loop).
            acc_scr[...] = jnp.zeros_like(acc_scr)
            for h in range(num_heads):
                sl = slice(h * head_size, (h + 1) * head_size)
                s = jax.lax.dot_general(q[:, sl], k_all[:, sl], qkt_dims,
                                        preferred_element_type=f32) + bias
                s = s - jnp.max(s, axis=-1, keepdims=True)
                e = jnp.exp(s)
                p = (e * pl.reciprocal(jnp.sum(e, axis=-1, keepdims=True),
                                       approx=True)).astype(bf16)
                ctx = jnp.dot(p, v_all[:, sl],
                              preferred_element_type=f32).astype(bf16)
                acc_scr[...] += jnp.dot(ctx, wo[sl, :],
                                        preferred_element_type=f32)
            h_res = acc_scr[...] + bo_ref[...] + y

        # TODO(synk): dropout layers are identity (inference); stochastic dropout not emitted.
        hres_scr[...] = h_res
        hn_scr[...] = _layer_norm(h_res, gf_ref[...], bf_ref[...]).astype(bf16)
        acc_scr[...] = jnp.zeros_like(acc_scr)                     # FFN accumulator

    # Position-wise FFN: one FF chunk per grid step -> W1/W2 never fully resident.
    f1 = jnp.maximum(
        jnp.dot(hn_scr[...], w1_ref[...], preferred_element_type=f32)
        + b1_ref[...], 0.0)
    acc_scr[...] += jnp.dot(f1.astype(bf16), w2_ref[...],
                            preferred_element_type=f32)

    @pl.when(nf == pl.num_programs(2) - 1)
    def _finish():
        o_ref[0] = (acc_scr[...] + b2_ref[...] + hres_scr[...]).astype(o_ref.dtype)


# ---------------------------------------------------------------------------
# Wrapper
# ---------------------------------------------------------------------------
def _tpu_budget():
    """Generation-aware defaults: (q_tile, vmem_limit_bytes)."""
    vmem_cap = 64 * 1024 * 1024
    try:
        vmem_cap = int(pltpu.get_tpu_info().vmem_capacity_bytes)
    except Exception:
        pass
    kind = ""
    try:
        kind = jax.devices()[0].device_kind.lower()
    except Exception:
        pass
    # v5*: 128-wide MXU / single vst slot -> TQ=128; v6e/v7x: 256-wide MXU -> 256.
    q_tile = 128 if "v5" in kind else 256
    # ~56 MiB on v7x (64 MiB/TC), ~112 MiB on v5e/v6e (128 MiB).
    vmem_limit = min(vmem_cap * 7 // 8, vmem_cap - 8 * 1024 * 1024)
    return q_tile, vmem_limit


def prepare_fusion_params(params):
    """Cast matmul weights to bf16 ONCE (call outside the per-step hot path)."""
    (gx, bx, gy, by, wq, bq, wk, bk, wv, bv, wo, bo,
     gf, bfp, w1, b1, w2, b2) = params
    cb = lambda w: w.astype(jnp.bfloat16)
    return (gx, bx, gy, by, cb(wq), bq, cb(wk), bk, cb(wv), bv, cb(wo), bo,
            gf, bfp, cb(w1), b1, cb(w2), b2)


def fusion_layer(x, y, mask, params, *, num_heads,
                 q_tile=None, kv_tile=512, ff_tile=None):
    B, Sq, D = y.shape
    _, Skv, _ = x.shape
    assert D % num_heads == 0
    head_size = D // num_heads

    q_tile_default, vmem_limit = _tpu_budget()
    if q_tile is None:
        q_tile = q_tile_default
    TQ = min(q_tile, Sq)
    TKV = min(kv_tile, Skv)
    NKV = pl.cdiv(Skv, TKV)

    (gx, bx, gy, by, wq, bq, wk, bk, wv, bv, wo, bo,
     gf, bfp, w1, b1, w2, b2) = params
    FF = w1.shape[1]
    if ff_tile is None:
        ff_tile = 1024
    TF = min(ff_tile, FF)
    if FF % TF != 0:
        TF = FF                                   # no clean chunking -> single chunk
    NF = FF // TF

    # No-op when params were prepared once via prepare_fusion_params().
    as_bf16 = lambda w: w if w.dtype == jnp.bfloat16 else w.astype(jnp.bfloat16)
    wq, wk, wv, wo, w1, w2 = map(as_bf16, (wq, wk, wv, wo, w1, w2))
    mask_i8 = mask if mask.dtype == jnp.int8 else (mask != 0).astype(jnp.int8)

    kv_cost = pl.CostEstimate(
        flops=int(2 * 2 * B * Skv * D * D),
        transcendentals=0,
        bytes_accessed=int(x.size * x.dtype.itemsize + 2 * B * Skv * D * 2
                           + (wk.size + wv.size) * 2
                           + (gx.size + bx.size + bk.size + bv.size) * 4))
    main_cost = pl.CostEstimate(
        flops=int(2 * B * (2 * Sq * D * D + 2 * Sq * Skv * D + 2 * Sq * D * FF)),
        transcendentals=int(B * num_heads * Sq * Skv),
        bytes_accessed=int(2 * y.size * y.dtype.itemsize + mask_i8.size
                           + 2 * B * Skv * D * 2
                           + (wq.size + wo.size + w1.size + w2.size) * 2
                           + (gy.size + by.size + bq.size + bo.size + gf.size
                              + bfp.size + b1.size + b2.size) * 4))

    kernel = functools.partial(fusion_attn_ffn_kernel,
                               num_heads=num_heads, head_size=head_size)

    def run(single_buffer, tq):
        nq = pl.cdiv(Sq, tq)
        sb = {"pipeline_mode": pl.Buffered(1)} if single_buffer else {}

        # ---- K/V projection ----
        def kvw(shape):
            return pl.BlockSpec(shape, lambda b, i: (0,) * len(shape), **sb)

        k_bf, v_bf = pl.pallas_call(
            kv_proj_kernel,
            out_shape=(jax.ShapeDtypeStruct((B, Skv, D), jnp.bfloat16),
                       jax.ShapeDtypeStruct((B, Skv, D), jnp.bfloat16)),
            grid=(B, NKV),
            in_specs=[pl.BlockSpec((1, TKV, D), lambda b, i: (b, i, 0)),
                      kvw(gx.shape), kvw(bx.shape),
                      kvw(wk.shape), kvw(bk.shape),
                      kvw(wv.shape), kvw(bv.shape)],
            out_specs=(pl.BlockSpec((1, TKV, D), lambda b, i: (b, i, 0)),
                       pl.BlockSpec((1, TKV, D), lambda b, i: (b, i, 0))),
            compiler_params=pltpu.CompilerParams(
                dimension_semantics=("parallel", "parallel"),
                vmem_limit_bytes=vmem_limit),
            cost_estimate=kv_cost,
        )(x, gx, bx, wk, bk, wv, bv)

        # ---- attention + chunked FFN ----
        def w_const(shape):
            # constant index_map -> DMA'd once; single-buffered when allowed
            return pl.BlockSpec(shape, lambda b, qi, f: (0,) * len(shape), **sb)

        in_specs = [
            pl.BlockSpec((1, tq, D), lambda b, qi, f: (b, qi, 0)),        # y
            pl.BlockSpec((1, tq, Skv), lambda b, qi, f: (b, qi, 0)),      # mask (int8)
            pl.BlockSpec((1, Skv, D), lambda b, qi, f: (b, 0, 0), **sb),  # K (batch-resident)
            pl.BlockSpec((1, Skv, D), lambda b, qi, f: (b, 0, 0), **sb),  # V (batch-resident)
            w_const(gy.shape), w_const(by.shape),
            w_const(wq.shape), w_const(bq.shape),
            w_const(wo.shape), w_const(bo.shape),
            w_const(gf.shape), w_const(bfp.shape),
            pl.BlockSpec((D, TF), lambda b, qi, f: (0, f)),               # W1 chunk
            pl.BlockSpec((1, TF), lambda b, qi, f: (0, f)),               # b1 chunk
            pl.BlockSpec((TF, D), lambda b, qi, f: (f, 0)),               # W2 chunk
            w_const(b2.shape),
        ]

        return pl.pallas_call(
            kernel,
            out_shape=jax.ShapeDtypeStruct((B, Sq, D), y.dtype),
            grid=(B, nq, NF),
            in_specs=in_specs,
            out_specs=pl.BlockSpec((1, tq, D), lambda b, qi, f: (b, qi, 0)),
            scratch_shapes=[pltpu.VMEM((tq, D), jnp.float32),    # attn / FFN accumulator
                            pltpu.VMEM((tq, D), jnp.float32),    # residual (h) carry
                            pltpu.VMEM((tq, D), jnp.bfloat16)],  # LN(h) / ctx scratch
            compiler_params=pltpu.CompilerParams(
                dimension_semantics=("parallel", "parallel", "arbitrary"),
                vmem_limit_bytes=vmem_limit),
            cost_estimate=main_cost,
        )(y, mask_i8, k_bf, v_bf, gy, by, wq, bq, wo, bo,
          gf, bfp, w1, b1, w2, b2)

    try:
        return run(True, TQ)
    except Exception:
        # This JAX/Mosaic build rejected pipeline_mode=pl.Buffered(1): fall back
        # to default double buffering, halving the q tile (when tiled) so the
        # doubled weight/K-V residency still fits the v7x VMEM budget.
        tq_fb = TQ if TQ == Sq else max(128, TQ // 2)
        return run(False, tq_fb)


# ---------------------------------------------------------------------------
# Pure-JAX reference (mirrors the PyTorch forward, dropout=identity, with the
# same bf16-operand / f32-accumulate matmul precision as the kernels).
# ---------------------------------------------------------------------------
def fusion_layer_ref(x, y, mask, params, *, num_heads):
    (gx, bx, gy, by, wq, bq, wk, bk, wv, bv, wo, bo,
     gf, bfp, w1, b1, w2, b2) = params
    eps = 1e-6
    D = x.shape[-1]
    hd = D // num_heads
    cb = lambda t: t.astype(jnp.bfloat16)
    mm = lambda a, w: jnp.dot(cb(a), cb(w), preferred_element_type=jnp.float32)

    def ln(v, g, b):
        mu = jnp.mean(v, axis=-1, keepdims=True)
        var = jnp.mean((v - mu) ** 2, axis=-1, keepdims=True)
        return (v - mu) / jnp.sqrt(var + eps) * g + b

    xn = ln(x, gx, bx)
    yn = ln(y, gy, by)
    k = mm(xn, wk) + bk
    v = mm(xn, wv) + bv
    q = (mm(yn, wq) + bq) / math.sqrt(hd)
    B, Sq, _ = q.shape
    Skv = k.shape[1]
    k = cb(k).reshape(B, Skv, num_heads, hd).transpose(0, 2, 1, 3)
    v = cb(v).reshape(B, Skv, num_heads, hd).transpose(0, 2, 1, 3)
    q = cb(q).reshape(B, Sq, num_heads, hd).transpose(0, 2, 1, 3)
    scores = jnp.einsum("bhqd,bhkd->bhqk", q, k,
                        preferred_element_type=jnp.float32)
    scores = scores + jnp.where(mask[:, None, :, :] != 0, 0.0, -1e30)
    attn = jax.nn.softmax(scores, axis=-1)
    ctx = jnp.einsum("bhqk,bhkd->bhqd", cb(attn), v,
                     preferred_element_type=jnp.float32)
    ctx = ctx.transpose(0, 2, 1, 3).reshape(B, Sq, D)
    h = mm(ctx, wo) + bo + y
    hn = ln(h, gf, bfp)
    return mm(jnp.maximum(mm(hn, w1) + b1, 0.0), w2) + b2 + h


if __name__ == "__main__":
    B, S, D, H, FF = 2, 8, 32, 4, 64

    key = jax.random.PRNGKey(0)
    keys = jax.random.split(key, 16)

    x = jax.random.normal(keys[0], (B, S, D), jnp.float32)
    y = jax.random.normal(keys[1], (B, S, D), jnp.float32)
    # Causal mask built directly as int8 (no per-call convert); one fully
    # masked query row exercises the padding path (must stay NaN-free).
    mask = jnp.tril(jnp.ones((S, S), jnp.int8))[None].repeat(B, axis=0)
    mask = mask.at[1, 0, :].set(0)

    def w(k, shape, scale):
        return jax.random.normal(k, shape, jnp.float32) * scale

    s_d = 1.0 / math.sqrt(D)
    s_f = 1.0 / math.sqrt(FF)
    params = (
        jnp.ones((1, D), jnp.float32),               # gx (x LayerNorm weight)
        jnp.zeros((1, D), jnp.float32),              # bx
        jnp.ones((1, D), jnp.float32),               # gy (y LayerNorm weight)
        jnp.zeros((1, D), jnp.float32),              # by
        w(keys[2], (D, D), s_d),                     # Wq
        w(keys[3], (1, D), s_d),                     # bq
        w(keys[4], (D, D), s_d),                     # Wk
        w(keys[5], (1, D), s_d),                     # bk
        w(keys[6], (D, D), s_d),                     # Wv
        w(keys[7], (1, D), s_d),                     # bv
        w(keys[8], (D, D), s_d),                     # Wo
        w(keys[9], (1, D), s_d),                     # bo
        jnp.ones((1, D), jnp.float32),               # gf (FF LayerNorm weight)
        jnp.zeros((1, D), jnp.float32),              # bf
        w(keys[10], (D, FF), s_d),                   # W1
        w(keys[11], (1, FF), s_d),                   # b1
        w(keys[12], (FF, D), s_f),                   # W2
        w(keys[13], (1, D), s_f),                    # b2
    )

    params_bf16 = prepare_fusion_params(params)      # one-time weight cast

    out = fusion_layer(x, y, mask, params_bf16, num_heads=H)
    out = jax.block_until_ready(out)

    ref = fusion_layer_ref(x, y, mask, params, num_heads=H)
    assert out.shape == (B, S, D)
    assert not bool(jnp.any(jnp.isnan(out)))
    err = float(jnp.max(jnp.abs(out - ref)))
    assert jnp.allclose(out, ref, rtol=2e-2, atol=2e-2), err

    print("KERNEL_OK")
</pallas_src>

<mosaic_0001>
module attributes {stable_mosaic.version = 11 : i64} {
  func.func @kv_proj_kernel(%arg0: i32, %arg1: i32, %arg2: memref<1x8x32xf32, #tpu.memory_space<vmem>>, %arg3: memref<1x32xf32, #tpu.memory_space<vmem>>, %arg4: memref<1x32xf32, #tpu.memory_space<vmem>>, %arg5: memref<32x32xbf16, #tpu.memory_space<vmem>>, %arg6: memref<1x32xf32, #tpu.memory_space<vmem>>, %arg7: memref<32x32xbf16, #tpu.memory_space<vmem>>, %arg8: memref<1x32xf32, #tpu.memory_space<vmem>>, %arg9: memref<1x8x32xbf16, #tpu.memory_space<vmem>>, %arg10: memref<1x8x32xbf16, #tpu.memory_space<vmem>>) attributes {dimension_semantics = [#tpu.dimension_semantics<parallel>, #tpu.dimension_semantics<parallel>], iteration_bounds = array<i64: 2, 1>, scalar_prefetch = 0 : i64, scratch_operands = 0 : i64, tpu.core_type = #tpu.core_type<tc>, window_params = [{transform_indices = @transform_0, window_bounds = array<i64: 1, 8, 32>}, {pipeline_mode = #tpu.pipeline_mode<synchronous>, transform_indices = @transform_1, window_bounds = array<i64: 1, 32>}, {pipeline_mode = #tpu.pipeline_mode<synchronous>, transform_indices = @transform_2, window_bounds = array<i64: 1, 32>}, {pipeline_mode = #tpu.pipeline_mode<synchronous>, transform_indices = @transform_3, window_bounds = array<i64: 32, 32>}, {pipeline_mode = #tpu.pipeline_mode<synchronous>, transform_indices = @transform_4, window_bounds = array<i64: 1, 32>}, {pipeline_mode = #tpu.pipeline_mode<synchronous>, transform_indices = @transform_5, window_bounds = array<i64: 32, 32>}, {pipeline_mode = #tpu.pipeline_mode<synchronous>, transform_indices = @transform_6, window_bounds = array<i64: 1, 32>}, {transform_indices = @transform_7, window_bounds = array<i64: 1, 8, 32>}, {transform_indices = @transform_8, window_bounds = array<i64: 1, 8, 32>}]} {
    %c0 = arith.constant 0 : index
    %c0_0 = arith.constant 0 : index
    %c0_1 = arith.constant 0 : index
    %0 = vector.load %arg2[%c0, %c0_0, %c0_1] : memref<1x8x32xf32, #tpu.memory_space<vmem>>, vector<1x8x32xf32>
    %1 = vector.shape_cast %0 : vector<1x8x32xf32> to vector<8x32xf32>
    %c0_2 = arith.constant 0 : index
    %c0_3 = arith.constant 0 : index
    %2 = vector.load %arg3[%c0_2, %c0_3] : memref<1x32xf32, #tpu.memory_space<vmem>>, vector<1x32xf32>
    %c0_4 = arith.constant 0 : index
    %c0_5 = arith.constant 0 : index
    %3 = vector.load %arg4[%c0_4, %c0_5] : memref<1x32xf32, #tpu.memory_space<vmem>>, vector<1x32xf32>
    %cst = arith.constant dense<0.000000e+00> : vector<8xf32>
    %4 = vector.multi_reduction <add>, %1, %cst [1] : vector<8x32xf32> to vector<8xf32>
    %5 = vector.shape_cast %4 : vector<8xf32> to vector<8x1xf32>
    %cst_6 = arith.constant 3.200000e+01 : f32
    %6 = vector.broadcast %cst_6 : f32 to vector<8x1xf32>
    %7 = arith.divf %5, %6 : vector<8x1xf32>
    %8 = vector.broadcast %7 : vector<8x1xf32> to vector<8x32xf32>
    %9 = arith.subf %1, %8 : vector<8x32xf32>
    %10 = arith.mulf %9, %9 : vector<8x32xf32>
    %cst_7 = arith.constant dense<0.000000e+00> : vector<8xf32>
    %11 = vector.multi_reduction <add>, %10, %cst_7 [1] : vector<8x32xf32> to vector<8xf32>
    %12 = vector.shape_cast %11 : vector<8xf32> to vector<8x1xf32>
    %cst_8 = arith.constant 3.200000e+01 : f32
    %13 = vector.broadcast %cst_8 : f32 to vector<8x1xf32>
    %14 = arith.divf %12, %13 : vector<8x1xf32>
    %15 = vector.broadcast %7 : vector<8x1xf32> to vector<8x32xf32>
    %16 = arith.subf %1, %15 : vector<8x32xf32>
    %cst_9 = arith.constant 9.99999997E-7 : f32
    %17 = vector.broadcast %cst_9 : f32 to vector<8x1xf32>
    %18 = arith.addf %14, %17 : vector<8x1xf32>
    %19 = math.rsqrt %18 : vector<8x1xf32>
    %20 = vector.broadcast %19 : vector<8x1xf32> to vector<8x32xf32>
    %21 = arith.mulf %16, %20 : vector<8x32xf32>
    %22 = vector.broadcast %2 : vector<1x32xf32> to vector<8x32xf32>
    %23 = arith.mulf %21, %22 : vector<8x32xf32>
    %24 = vector.broadcast %3 : vector<1x32xf32> to vector<8x32xf32>
    %25 = arith.addf %23, %24 : vector<8x32xf32>
    %26 = arith.truncf %25 : vector<8x32xf32> to vector<8x32xbf16>
    %c0_10 = arith.constant 0 : index
    %c0_11 = arith.constant 0 : index
    %27 = vector.load %arg5[%c0_10, %c0_11] : memref<32x32xbf16, #tpu.memory_space<vmem>>, vector<32x32xbf16>
    %cst_12 = arith.constant dense<0.000000e+00> : vector<8x32xf32>
    %28 = tpu.matmul %26, %27, %cst_12 {dimension_numbers = #tpu.dot_dimension_numbers<[1], [0], [0], [1], [0, 0, 1, 1], [], []>} : vector<8x32xbf16>, vector<32x32xbf16>, vector<8x32xf32> -> vector<8x32xf32>
    %c0_13 = arith.constant 0 : index
    %c0_14 = arith.constant 0 : index
    %29 = vector.load %arg6[%c0_13, %c0_14] : memref<1x32xf32, #tpu.memory_space<vmem>>, vector<1x32xf32>
    %30 = vector.broadcast %29 : vector<1x32xf32> to vector<8x32xf32>
    %31 = arith.addf %28, %30 : vector<8x32xf32>
    %c0_15 = arith.constant 0 : index
    %c0_16 = arith.constant 0 : index
    %32 = vector.load %arg7[%c0_15, %c0_16] : memref<32x32xbf16, #tpu.memory_space<vmem>>, vector<32x32xbf16>
    %cst_17 = arith.constant dense<0.000000e+00> : vector<8x32xf32>
    %33 = tpu.matmul %26, %32, %cst_17 {dimension_numbers = #tpu.dot_dimension_numbers<[1], [0], [0], [1], [0, 0, 1, 1], [], []>} : vector<8x32xbf16>, vector<32x32xbf16>, vector<8x32xf32> -> vector<8x32xf32>
    %c0_18 = arith.constant 0 : index
    %c0_19 = arith.constant 0 : index
    %34 = vector.load %arg8[%c0_18, %c0_19] : memref<1x32xf32, #tpu.memory_space<vmem>>, vector<1x32xf32>
    %35 = vector.broadcast %34 : vector<1x32xf32> to vector<8x32xf32>
    %36 = arith.addf %33, %35 : vector<8x32xf32>
    %37 = arith.truncf %31 : vector<8x32xf32> to vector<8x32xbf16>
    %c0_20 = arith.constant 0 : index
    %c0_21 = arith.constant 0 : index
    %c0_22 = arith.constant 0 : index
    %38 = vector.load %arg9[%c0_20, %c0_21, %c0_22] : memref<1x8x32xbf16, #tpu.memory_space<vmem>>, vector<1x8x32xbf16>
    %39 = vector.shape_cast %38 : vector<1x8x32xbf16> to vector<8x32xbf16>
    %40 = vector.shape_cast %37 : vector<8x32xbf16> to vector<1x8x32xbf16>
    tpu.vector_store %arg9[%c0_20, %c0_21, %c0_22], %40 {strides = array<i32>} : memref<1x8x32xbf16, #tpu.memory_space<vmem>>, vector<1x8x32xbf16>,
    %41 = arith.truncf %36 : vector<8x32xf32> to vector<8x32xbf16>
    %c0_23 = arith.constant 0 : index
    %c0_24 = arith.constant 0 : index
    %c0_25 = arith.constant 0 : index
    %42 = vector.load %arg10[%c0_23, %c0_24, %c0_25] : memref<1x8x32xbf16, #tpu.memory_space<vmem>>, vector<1x8x32xbf16>
    %43 = vector.shape_cast %42 : vector<1x8x32xbf16> to vector<8x32xbf16>
    %44 = vector.shape_cast %41 : vector<8x32xbf16> to vector<1x8x32xbf16>
    tpu.vector_store %arg10[%c0_23, %c0_24, %c0_25], %44 {strides = array<i32>} : memref<1x8x32xbf16, #tpu.memory_space<vmem>>, vector<1x8x32xbf16>,
    return
  }
  func.func @transform_0(%arg0: i32, %arg1: i32) -> (i32, i32, i32) {
    %c0_i32 = arith.constant 0 : i32
    %c0_i32_0 = arith.constant 0 : i32
    return %arg0, %arg1, %c0_i32 : i32, i32, i32
  }
  func.func @transform_1(%arg0: i32, %arg1: i32) -> (i32, i32) {
    %c0_i32 = arith.constant 0 : i32
    %c0_i32_0 = arith.constant 0 : i32
    %c0_i32_1 = arith.constant 0 : i32
    return %c0_i32, %c0_i32_0 : i32, i32
  }
  func.func @transform_2(%arg0: i32, %arg1: i32) -> (i32, i32) {
    %c0_i32 = arith.constant 0 : i32
    %c0_i32_0 = arith.constant 0 : i32
    %c0_i32_1 = arith.constant 0 : i32
    return %c0_i32, %c0_i32_0 : i32, i32
  }
  func.func @transform_3(%arg0: i32, %arg1: i32) -> (i32, i32) {
    %c0_i32 = arith.constant 0 : i32
    %c0_i32_0 = arith.constant 0 : i32
    %c0_i32_1 = arith.constant 0 : i32
    return %c0_i32, %c0_i32_0 : i32, i32
  }
  func.func @transform_4(%arg0: i32, %arg1: i32) -> (i32, i32) {
    %c0_i32 = arith.constant 0 : i32
    %c0_i32_0 = arith.constant 0 : i32
    %c0_i32_1 = arith.constant 0 : i32
    return %c0_i32, %c0_i32_0 : i32, i32
  }
  func.func @transform_5(%arg0: i32, %arg1: i32) -> (i32, i32) {
    %c0_i32 = arith.constant 0 : i32
    %c0_i32_0 = arith.constant 0 : i32
    %c0_i32_1 = arith.constant 0 : i32
    return %c0_i32, %c0_i32_0 : i32, i32
  }
  func.func @transform_6(%arg0: i32, %arg1: i32) -> (i32, i32) {
    %c0_i32 = arith.constant 0 : i32
    %c0_i32_0 = arith.constant 0 : i32
    %c0_i32_1 = arith.constant 0 : i32
    return %c0_i32, %c0_i32_0 : i32, i32
  }
  func.func @transform_7(%arg0: i32, %arg1: i32) -> (i32, i32, i32) {
    %c0_i32 = arith.constant 0 : i32
    %c0_i32_0 = arith.constant 0 : i32
    return %arg0, %arg1, %c0_i32 : i32, i32, i32
  }
  func.func @transform_8(%arg0: i32, %arg1: i32) -> (i32, i32, i32) {
    %c0_i32 = arith.constant 0 : i32
    %c0_i32_0 = arith.constant 0 : i32
    return %arg0, %arg1, %c0_i32 : i32, i32, i32
  }
}

module attributes {stable_mosaic.version = 11 : i64} {
  func.func @kv_proj_kernel(%arg0: i32, %arg1: i32, %arg2: memref<1x8x32xf32, #tpu.memory_space<vmem>>, %arg3: memref<1x32xf32, #tpu.memory_space<vmem>>, %arg4: memref<1x32xf32, #tpu.memory_space<vmem>>, %arg5: memref<32x32xbf16, #tpu.memory_space<vmem>>, %arg6: memref<1x32xf32, #tpu.memory_space<vmem>>, %arg7: memref<32x32xbf16, #tpu.memory_space<vmem>>, %arg8: memref<1x32xf32, #tpu.memory_space<vmem>>, %arg9: memref<1x8x32xbf16, #tpu.memory_space<vmem>>, %arg10: memref<1x8x32xbf16, #tpu.memory_space<vmem>>) attributes {dimension_semantics = [#tpu.dimension_semantics<parallel>, #tpu.dimension_semantics<parallel>], iteration_bounds = array<i64: 2, 1>, scalar_prefetch = 0 : i64, scratch_operands = 0 : i64, tpu.core_type = #tpu.core_type<tc>, window_params = [{transform_indices = @transform_0, window_bounds = array<i64: 1, 8, 32>}, {pipeline_mode = #tpu.pipeline_mode<synchronous>, transform_indices = @transform_1, window_bounds = array<i64: 1, 32>}, {pipeline_mode = #tpu.pipeline_mode<synchronous>, transform_indices = @transform_2, window_bounds = array<i64: 1, 32>}, {pipeline_mode = #tpu.pipeline_mode<synchronous>, transform_indices = @transform_3, window_bounds = array<i64: 32, 32>}, {pipeline_mode = #tpu.pipeline_mode<synchronous>, transform_indices = @transform_4, window_bounds = array<i64: 1, 32>}, {pipeline_mode = #tpu.pipeline_mode<synchronous>, transform_indices = @transform_5, window_bounds = array<i64: 32, 32>}, {pipeline_mode = #tpu.pipeline_mode<synchronous>, transform_indices = @transform_6, window_bounds = array<i64: 1, 32>}, {transform_indices = @transform_7, window_bounds = array<i64: 1, 8, 32>}, {transform_indices = @transform_8, window_bounds = array<i64: 1, 8, 32>}]} {
    %c0 = arith.constant 0 : index
    %c0_0 = arith.constant 0 : index
    %c0_1 = arith.constant 0 : index
    %0 = vector.load %arg2[%c0, %c0_0, %c0_1] : memref<1x8x32xf32, #tpu.memory_space<vmem>>, vector<1x8x32xf32>
    %1 = vector.shape_cast %0 : vector<1x8x32xf32> to vector<8x32xf32>
    %c0_2 = arith.constant 0 : index
    %c0_3 = arith.constant 0 : index
    %2 = vector.load %arg3[%c0_2, %c0_3] : memref<1x32xf32, #tpu.memory_space<vmem>>, vector<1x32xf32>
    %c0_4 = arith.constant 0 : index
    %c0_5 = arith.constant 0 : index
    %3 = vector.load %arg4[%c0_4, %c0_5] : memref<1x32xf32, #tpu.memory_space<vmem>>, vector<1x32xf32>
    %cst = arith.constant dense<0.000000e+00> : vector<8xf32>
    %4 = vector.multi_reduction <add>, %1, %cst [1] : vector<8x32xf32> to vector<8xf32>
    %5 = vector.shape_cast %4 : vector<8xf32> to vector<8x1xf32>
    %cst_6 = arith.constant 3.200000e+01 : f32
    %6 = vector.broadcast %cst_6 : f32 to vector<8x1xf32>
    %7 = arith.divf %5, %6 : vector<8x1xf32>
    %8 = vector.broadcast %7 : vector<8x1xf32> to vector<8x32xf32>
    %9 = arith.subf %1, %8 : vector<8x32xf32>
    %10 = arith.mulf %9, %9 : vector<8x32xf32>
    %cst_7 = arith.constant dense<0.000000e+00> : vector<8xf32>
    %11 = vector.multi_reduction <add>, %10, %cst_7 [1] : vector<8x32xf32> to vector<8xf32>
    %12 = vector.shape_cast %11 : vector<8xf32> to vector<8x1xf32>
    %cst_8 = arith.constant 3.200000e+01 : f32
    %13 = vector.broadcast %cst_8 : f32 to vector<8x1xf32>
    %14 = arith.divf %12, %13 : vector<8x1xf32>
    %15 = vector.broadcast %7 : vector<8x1xf32> to vector<8x32xf32>
    %16 = arith.subf %1, %15 : vector<8x32xf32>
    %cst_9 = arith.constant 9.99999997E-7 : f32
    %17 = vector.broadcast %cst_9 : f32 to vector<8x1xf32>
    %18 = arith.addf %14, %17 : vector<8x1xf32>
    %19 = math.rsqrt %18 : vector<8x1xf32>
    %20 = vector.broadcast %19 : vector<8x1xf32> to vector<8x32xf32>
    %21 = arith.mulf %16, %20 : vector<8x32xf32>
    %22 = vector.broadcast %2 : vector<1x32xf32> to vector<8x32xf32>
    %23 = arith.mulf %21, %22 : vector<8x32xf32>
    %24 = vector.broadcast %3 : vector<1x32xf32> to vector<8x32xf32>
    %25 = arith.addf %23, %24 : vector<8x32xf32>
    %26 = arith.truncf %25 : vector<8x32xf32> to vector<8x32xbf16>
    %c0_10 = arith.constant 0 : index
    %c0_11 = arith.constant 0 : index
    %27 = vector.load %arg5[%c0_10, %c0_11] : memref<32x32xbf16, #tpu.memory_space<vmem>>, vector<32x32xbf16>
    %cst_12 = arith.constant dense<0.000000e+00> : vector<8x32xf32>
    %28 = tpu.matmul %26, %27, %cst_12 {dimension_numbers = #tpu.dot_dimension_numbers<[1], [0], [0], [1], [0, 0, 1, 1], [], []>} : vector<8x32xbf16>, vector<32x32xbf16>, vector<8x32xf32> -> vector<8x32xf32>
    %c0_13 = arith.constant 0 : index
    %c0_14 = arith.constant 0 : index
    %29 = vector.load %arg6[%c0_13, %c0_14] : memref<1x32xf32, #tpu.memory_space<vmem>>, vector<1x32xf32>
    %30 = vector.broadcast %29 : vector<1x32xf32> to vector<8x32xf32>
    %31 = arith.addf %28, %30 : vector<8x32xf32>
    %c0_15 = arith.constant 0 : index
    %c0_16 = arith.constant 0 : index
    %32 = vector.load %arg7[%c0_15, %c0_16] : memref<32x32xbf16, #tpu.memory_space<vmem>>, vector<32x32xbf16>
    %cst_17 = arith.constant dense<0.000000e+00> : vector<8x32xf32>
    %33 = tpu.matmul %26, %32, %cst_17 {dimension_numbers = #tpu.dot_dimension_numbers<[1], [0], [0], [1], [0, 0, 1, 1], [], []>} : vector<8x32xbf16>, vector<32x32xbf16>, vector<8x32xf32> -> vector<8x32xf32>
    %c0_18 = arith.constant 0 : index
    %c0_19 = arith.constant 0 : index
    %34 = vector.load %arg8[%c0_18, %c0_19] : memref<1x32xf32, #tpu.memory_space<vmem>>, vector<1x32xf32>
    %35 = vector.broadcast %34 : vector<1x32xf32> to vector<8x32xf32>
    %36 = arith.addf %33, %35 : vector<8x32xf32>
    %37 = arith.truncf %31 : vector<8x32xf32> to vector<8x32xbf16>
    %c0_20 = arith.constant 0 : index
    %c0_21 = arith.constant 0 : index
    %c0_22 = arith.constant 0 : index
    %38 = vector.load %arg9[%c0_20, %c0_21, %c0_22] : memref<1x8x32xbf16, #tpu.memory_space<vmem>>, vector<1x8x32xbf16>
    %39 = vector.shape_cast %38 : vector<1x8x32xbf16> to vector<8x32xbf16>
    %40 = vector.shape_cast %37 : vector<8x32xbf16> to vector<1x8x32xbf16>
    tpu.vector_store %arg9[%c0_20, %c0_21, %c0_22], %40 {strides = array<i32>} : memref<1x8x32xbf16, #tpu.memory_space<vmem>>, vector<1x8x32xbf16>,
    %41 = arith.truncf %36 : vector<8x32xf32> to vector<8x32xbf16>
    %c0_23 = arith.constant 0 : index
    %c0_24 = arith.constant 0 : index
    %c0_25 = arith.constant 0 : index
    %42 = vector.load %arg10[%c0_23, %c0_24, %c0_25] : memref<1x8x32xbf16, #tpu.memory_space<vmem>>, vector<1x8x32xbf16>
    %43 = vector.shape_cast %42 : vector<1x8x32xbf16> to vector<8x32xbf16>
    %44 = vector.shape_cast %41 : vector<8x32xbf16> to vector<1x8x32xbf16>
    tpu.vector_store %arg10[%c0_23, %c0_24, %c0_25], %44 {strides = array<i32>} : memref<1x8x32xbf16, #tpu.memory_space<vmem>>, vector<1x8x32xbf16>,
    return
  }
  func.func @transform_0(%arg0: i32, %arg1: i32) -> (i32, i32, i32) {
    %c0_i32 = arith.constant 0 : i32
    %c0_i32_0 = arith.constant 0 : i32
    return %arg0, %arg1, %c0_i32 : i32, i32, i32
  }
  func.func @transform_1(%arg0: i32, %arg1: i32) -> (i32, i32) {
    %c0_i32 = arith.constant 0 : i32
    %c0_i32_0 = arith.constant 0 : i32
    %c0_i32_1 = arith.constant 0 : i32
    return %c0_i32, %c0_i32_0 : i32, i32
  }
  func.func @transform_2(%arg0: i32, %arg1: i32) -> (i32, i32) {
    %c0_i32 = arith.constant 0 : i32
    %c0_i32_0 = arith.constant 0 : i32
    %c0_i32_1 = arith.constant 0 : i32
    return %c0_i32, %c0_i32_0 : i32, i32
  }
  func.func @transform_3(%arg0: i32, %arg1: i32) -> (i32, i32) {
    %c0_i32 = arith.constant 0 : i32
    %c0_i32_0 = arith.constant 0 : i32
    %c0_i32_1 = arith.constant 0 : i32
    return %c0_i32, %c0_i32_0 : i32, i32
  }
  func.func @transform_4(%arg0: i32, %arg1: i32) -> (i32, i32) {
    %c0_i32 = arith.constant 0 : i32
    %c0_i32_0 = arith.constant 0 : i32
    %c0_i32_1 = arith.constant 0 : i32
    return %c0_i32, %c0_i32_0 : i32, i32
  }
  func.func @transform_5(%arg0: i32, %arg1: i32) -> (i32, i32) {
    %c0_i32 = arith.constant 0 : i32
    %c0_i32_0 = arith.constant 0 : i32
    %c0_i32_1 = arith.constant 0 : i32
    return %c0_i32, %c0_i32_0 : i32, i32
  }
  func.func @transform_6(%arg0: i32, %arg1: i32) -> (i32, i32) {
    %c0_i32 = arith.constant 0 : i32
    %c0_i32_0 = arith.constant 0 : i32
    %c0_i32_1 = arith.constant 0 : i32
    return %c0_i32, %c0_i32_0 : i32, i32
  }
  func.func @transform_7(%arg0: i32, %arg1: i32) -> (i32, i32, i32) {
    %c0_i32 = arith.constant 0 : i32
    %c0_i32_0 = arith.constant 0 : i32
    return %arg0, %arg1, %c0_i32 : i32, i32, i32
  }
  func.func @transform_8(%arg0: i32, %arg1: i32) -> (i32, i32, i32) {
    %c0_i32 = arith.constant 0 : i32
    %c0_i32_0 = arith.constant 0 : i32
    return %arg0, %arg1, %c0_i32 : i32, i32, i32
  }
}

</mosaic_0001>

<llo_original>
// kernel: tpu_custom_call.1
$region0: #{tpu_custom_call.1}
  #allocation0 [shape = 'u32[]', space=smem, size = 0x4, offset = 0x4, fixed_abs, tag = 'smem constant byte address 0x4 - core index']
  #allocation1 [shape = 'u32[144,128]{1,0:T(1,128)}', space=vmem, size = 0x12000, scoped, tag = 'internal scratch']
  %s0 = inlined_call_operand.hbm [shape: f32[2,8,32], index: 0, kind: input, shape index: {}]
  %s1 = inlined_call_operand.vmem [shape: f32[1,32], index: 1, kind: input, shape index: {}]
  %s2 = inlined_call_operand.vmem [shape: f32[1,32], index: 2, kind: input, shape index: {}]
  %s3 = inlined_call_operand.hbm [shape: bf16[32,32], index: 3, kind: input, shape index: {}]
  %s4 = inlined_call_operand.hbm [shape: f32[1,32], index: 4, kind: input, shape index: {}]
  %s5 = inlined_call_operand.vmem [shape: bf16[32,32], index: 5, kind: input, shape index: {}]
  %s6 = inlined_call_operand.vmem [shape: f32[1,32], index: 6, kind: input, shape index: {}]
  %s7 = inlined_call_operand.hbm [shape: bf16[2,8,32], index: 7, kind: output, shape index: {0}]
  %s8 = inlined_call_operand.hbm [shape: bf16[2,8,32], index: 8, kind: output, shape index: {1}]
  %9 = xla_tuple %s7, %s8
  %s10 = sld [smem:[#allocation0]]
  $region81: #{tpu_custom_call.1} parent=0
    _
  %s12 = ssub.s32 1, %s10
  %s13 = scalar_select 0, %s12, %s10
  $region1: #{tpu_custom_call.1} parent=0
    #allocation2 [shape = 'u8[8192]{0}', space=vmem, size = 0x2000, scoped, tag = 'input window, operand 0']
    #allocation3 [shape = 's32[2]{0}', space=sflag, size = 0x8, scoped, tag = 'scoped memory for tpu_custom_call.1']
    #allocation4 [shape = 's32[2]{0}', space=sflag, size = 0x8, scoped, tag = 'scoped memory for tpu_custom_call.1']
    #allocation5 [shape = 'u8[8192]{0}', space=vmem, size = 0x2000, scoped, tag = 'input window, operand 3, single buffered']
    #allocation6 [shape = 's32[1]{0}', space=sflag, size = 0x4, scoped, tag = 'scoped memory for tpu_custom_call.1']
    #allocation7 [shape = 'u8[512]{0}', space=vmem, size = 0x400, scoped, tag = 'input window, operand 4, single buffered']
    #allocation8 [shape = 'u8[4096]{0}', space=vmem, size = 0x1000, scoped, tag = 'output window, operand 0']
    #allocation9 [shape = 'u8[4096]{0}', space=vmem, size = 0x1000, scoped, tag = 'output window, operand 1']
    #allocation10 [shape = 's32[2]{0}', space=sflag, size = 0x8, scoped, tag = 'scoped memory for tpu_custom_call.1']
    %14 = vsyncpa [#allocation3], 0
    %s15 = scalar_lea.sflag [#allocation3], 1
    %16 = vsyncpa %s15, 0
    %17 = vsyncpa [#allocation6], 0
    %18 = vsyncpa [#allocation4], 0
    %s19 = scalar_lea.sflag [#allocation4], 1
    %20 = vsyncpa %s19, 0
    %21 = vsyncpa [#allocation10], 0
    %s22 = scalar_lea.sflag [#allocation10], 1
    %23 = vsyncpa %s22, 0
    loop: start=0, step=1, limit=4
    $region2: #{tpu_custom_call.1} parent=1 // loop_pre_header
      _
    $region3: #{tpu_custom_call.1} parent=1 // loop_header
      %s25 = sphi 0, %s29
      %p26 = scmp.ge.s32.totalorder %s25, 4
      %s32 = sphi 0, %s44
      %s33 = sphi 0, %s40
      %s34 = sphi 0, %s32
      %s35 = sphi 0, %s33
      %s36 = sphi 0, %s34
      %s37 = sphi 0, %s35
      %s49 = sphi 0, %s51
      %s52 = sphi 0, %s49
      %s53 = sphi 0, %s52
      %s69 = sphi 0, %s53
      %s73 = sphi 0, %s73
      %s75 = sphi 0, %s73
      %s76 = sphi 0, %s75
      %s90 = sphi 0, %s76
      %s94 = sphi 0, %s94
      %s96 = sphi 0, %s94
      %s97 = sphi 0, %s96
      %s111 = sphi 0, %s97
      %s115 = sphi 0, %s115
      %s117 = sphi 0, %s115
      %s118 = sphi 0, %s117
      %s132 = sphi 0, %s118
      %s136 = sphi 0, %s136
      %s138 = sphi 0, %s136
      %s139 = sphi 0, %s138
      %s153 = sphi 0, %s139
      %s157 = sphi 0, %s157
      %s159 = sphi 0, %s157
      %s160 = sphi 0, %s159
      %s174 = sphi 0, %s160
      %s178 = sphi 0, %s178
      %s180 = sphi 0, %s178
      %s181 = sphi 0, %s180
      %s195 = sphi 0, %s181
      %s203 = sphi 0, %s205
      %s206 = sphi 0, %s203
      %s207 = sphi 0, %s206
      %s223 = sphi 0, %s207
      %s231 = sphi 0, %s233
      %s234 = sphi 0, %s231
      %s235 = sphi 0, %s234
      %s251 = sphi 0, %s235
    $region4: #{tpu_custom_call.1} parent=1 // loop_header_branch
      %28 = sbr.rel (%p26) target = $region8
    $region5: #{tpu_custom_call.1} parent=1 // loop_body
      %s30 = ssub.s32 %s25, 1
      %s31 = ssub.s32 %s25, 2
      %s38 = sadd.s32 1, %s33
      %p39 = scmp.ge.s32.totalorder %s38, 1
      %s40 = scalar_select %p39, 0, %s38
      %s41 = sadd.s32 1, %s32
      %s42 = scalar_select %p39, %s41, %s32
      %p43 = scmp.ge.s32.totalorder %s42, 2
      %s44 = scalar_select %p43, 0, %s42
      %s45 = ssub.s32 %s32, %s44
      %s46 = ssub.s32 %s33, %s40
      %s47 = sor.u32 %s45, %s46
      %p48 = scmp.eq.s32.totalorder %s47, 0
      %s50 = sadd.s32 %s49, 1
      %s51 = scalar_select %p48, %s49, %s50
      %p54 = pneg %p48
      %p55 = scmp.eq.s32.totalorder %s25, 1
      %p56 = por %p54, %p55
      %p57 = scmp.ne.s32.totalorder %s49, %s52
      %p58 = scmp.eq.s32.totalorder %s25, 0
      %p59 = por %p57, %p58
      %p60 = scmp.ne.s32.totalorder %s49, %s52
      %p61 = scmp.eq.s32.totalorder %s30, 1
      %p62 = por %p60, %p61
      %p63 = scmp.ne.s32.totalorder %s52, %s53
      %p64 = scmp.eq.s32.totalorder %s30, 0
      %p65 = por %p63, %p64
      %p66 = scmp.ne.s32.totalorder %s52, %s53
      %p67 = scmp.eq.s32.totalorder %s31, 1
      %p68 = por %p66, %p67
      %p70 = scmp.ne.s32.totalorder %s53, %s69
      %p71 = scmp.eq.s32.totalorder %s31, 0
      %p72 = por %p70, %p71
      %s74 = sadd.s32 %s73, 1
      %p77 = scmp.eq.s32.totalorder %s25, 1
      %p78 = scmp.ne.s32.totalorder %s73, %s75
      %p79 = scmp.eq.s32.totalorder %s25, 0
      %p80 = por %p78, %p79
      %p81 = scmp.ne.s32.totalorder %s73, %s75
      %p82 = scmp.eq.s32.totalorder %s30, 1
      %p83 = por %p81, %p82
      %p84 = scmp.ne.s32.totalorder %s75, %s76
      %p85 = scmp.eq.s32.totalorder %s30, 0
      %p86 = por %p84, %p85
      %p87 = scmp.ne.s32.totalorder %s75, %s76
      %p88 = scmp.eq.s32.totalorder %s31, 1
      %p89 = por %p87, %p88
      %p91 = scmp.ne.s32.totalorder %s76, %s90
      %p92 = scmp.eq.s32.totalorder %s31, 0
      %p93 = por %p91, %p92
      %s95 = sadd.s32 %s94, 1
      %p98 = scmp.eq.s32.totalorder %s25, 1
      %p99 = scmp.ne.s32.totalorder %s94, %s96
      %p100 = scmp.eq.s32.totalorder %s25, 0
      %p101 = por %p99, %p100
      %p102 = scmp.ne.s32.totalorder %s94, %s96
      %p103 = scmp.eq.s32.totalorder %s30, 1
      %p104 = por %p102, %p103
      %p105 = scmp.ne.s32.totalorder %s96, %s97
      %p106 = scmp.eq.s32.totalorder %s30, 0
      %p107 = por %p105, %p106
      %p108 = scmp.ne.s32.totalorder %s96, %s97
      %p109 = scmp.eq.s32.totalorder %s31, 1
      %p110 = por %p108, %p109
      %p112 = scmp.ne.s32.totalorder %s97, %s111
      %p113 = scmp.eq.s32.totalorder %s31, 0
      %p114 = por %p112, %p113
      %s116 = sadd.s32 %s115, 1
      %p119 = scmp.eq.s32.totalorder %s25, 1
      %p120 = scmp.ne.s32.totalorder %s115, %s117
      %p121 = scmp.eq.s32.totalorder %s25, 0
      %p122 = por %p120, %p121
      %p123 = scmp.ne.s32.totalorder %s115, %s117
      %p124 = scmp.eq.s32.totalorder %s30, 1
      %p125 = por %p123, %p124
      %p126 = scmp.ne.s32.totalorder %s117, %s118
      %p127 = scmp.eq.s32.totalorder %s30, 0
      %p128 = por %p126, %p127
      %p129 = scmp.ne.s32.totalorder %s117, %s118
      %p130 = scmp.eq.s32.totalorder %s31, 1
      %p131 = por %p129, %p130
      %p133 = scmp.ne.s32.totalorder %s118, %s132
      %p134 = scmp.eq.s32.totalorder %s31, 0
      %p135 = por %p133, %p134
      %s137 = sadd.s32 %s136, 1
      %p140 = scmp.eq.s32.totalorder %s25, 1
      %p141 = scmp.ne.s32.totalorder %s136, %s138
      %p142 = scmp.eq.s32.totalorder %s25, 0
      %p143 = por %p141, %p142
      %p144 = scmp.ne.s32.totalorder %s136, %s138
      %p145 = scmp.eq.s32.totalorder %s30, 1
      %p146 = por %p144, %p145
      %p147 = scmp.ne.s32.totalorder %s138, %s139
      %p148 = scmp.eq.s32.totalorder %s30, 0
      %p149 = por %p147, %p148
      %p150 = scmp.ne.s32.totalorder %s138, %s139
      %p151 = scmp.eq.s32.totalorder %s31, 1
      %p152 = por %p150, %p151
      %p154 = scmp.ne.s32.totalorder %s139, %s153
      %p155 = scmp.eq.s32.totalorder %s31, 0
      %p156 = por %p154, %p155
      %s158 = sadd.s32 %s157, 1
      %p161 = scmp.eq.s32.totalorder %s25, 1
      %p162 = scmp.ne.s32.totalorder %s157, %s159
      %p163 = scmp.eq.s32.totalorder %s25, 0
      %p164 = por %p162, %p163
      %p165 = scmp.ne.s32.totalorder %s157, %s159
      %p166 = scmp.eq.s32.totalorder %s30, 1
      %p167 = por %p165, %p166
      %p168 = scmp.ne.s32.totalorder %s159, %s160
      %p169 = scmp.eq.s32.totalorder %s30, 0
      %p170 = por %p168, %p169
      %p171 = scmp.ne.s32.totalorder %s159, %s160
      %p172 = scmp.eq.s32.totalorder %s31, 1
      %p173 = por %p171, %p172
      %p175 = scmp.ne.s32.totalorder %s160, %s174
      %p176 = scmp.eq.s32.totalorder %s31, 0
      %p177 = por %p175, %p176
      %s179 = sadd.s32 %s178, 1
      %p182 = scmp.eq.s32.totalorder %s25, 1
      %p183 = scmp.ne.s32.totalorder %s178, %s180
      %p184 = scmp.eq.s32.totalorder %s25, 0
      %p185 = por %p183, %p184
      %p186 = scmp.ne.s32.totalorder %s178, %s180
      %p187 = scmp.eq.s32.totalorder %s30, 1
      %p188 = por %p186, %p187
      %p189 = scmp.ne.s32.totalorder %s180, %s181
      %p190 = scmp.eq.s32.totalorder %s30, 0
      %p191 = por %p189, %p190
      %p192 = scmp.ne.s32.totalorder %s180, %s181
      %p193 = scmp.eq.s32.totalorder %s31, 1
      %p194 = por %p192, %p193
      %p196 = scmp.ne.s32.totalorder %s181, %s195
      %p197 = scmp.eq.s32.totalorder %s31, 0
      %p198 = por %p196, %p197
      %s199 = ssub.s32 %s32, %s44
      %s200 = ssub.s32 %s33, %s40
      %s201 = sor.u32 %s199, %s200
      %p202 = scmp.eq.s32.totalorder %s201, 0
      %s204 = sadd.s32 %s203, 1
      %s205 = scalar_select %p202, %s203, %s204
      %p208 = pneg %p202
      %p209 = scmp.eq.s32.totalorder %s25, 1
      %p210 = por %p208, %p209
      %p211 = scmp.ne.s32.totalorder %s203, %s206
      %p212 = scmp.eq.s32.totalorder %s25, 0
      %p213 = por %p211, %p212
      %p214 = scmp.ne.s32.totalorder %s203, %s206
      %p215 = scmp.eq.s32.totalorder %s30, 1
      %p216 = por %p214, %p215
      %p217 = scmp.ne.s32.totalorder %s206, %s207
      %p218 = scmp.eq.s32.totalorder %s30, 0
      %p219 = por %p217, %p218
      %p220 = scmp.ne.s32.totalorder %s206, %s207
      %p221 = scmp.eq.s32.totalorder %s31, 1
      %p222 = por %p220, %p221
      %p224 = scmp.ne.s32.totalorder %s207, %s223
      %p225 = scmp.eq.s32.totalorder %s31, 0
      %p226 = por %p224, %p225
      %s227 = ssub.s32 %s32, %s44
      %s228 = ssub.s32 %s33, %s40
      %s229 = sor.u32 %s227, %s228
      %p230 = scmp.eq.s32.totalorder %s229, 0
      %s232 = sadd.s32 %s231, 1
      %s233 = scalar_select %p230, %s231, %s232
      %p236 = pneg %p230
      %p237 = scmp.eq.s32.totalorder %s25, 1
      %p238 = por %p236, %p237
      %p239 = scmp.ne.s32.totalorder %s231, %s234
      %p240 = scmp.eq.s32.totalorder %s25, 0
      %p241 = por %p239, %p240
      %p242 = scmp.ne.s32.totalorder %s231, %s234
      %p243 = scmp.eq.s32.totalorder %s30, 1
      %p244 = por %p242, %p243
      %p245 = scmp.ne.s32.totalorder %s234, %s235
      %p246 = scmp.eq.s32.totalorder %s30, 0
      %p247 = por %p245, %p246
      %p248 = scmp.ne.s32.totalorder %s234, %s235
      %p249 = scmp.eq.s32.totalorder %s31, 1
      %p250 = por %p248, %p249
      %p252 = scmp.ne.s32.totalorder %s235, %s251
      %p253 = scmp.eq.s32.totalorder %s31, 0
      %p254 = por %p252, %p253
      %p255 = scmp.le.s32.totalorder 1, %s25
      %p256 = scmp.lt.s32.totalorder %s25, 3
      %p257 = pnand %p255, %p256
      %p258 = pneg %p257
      // Predicated region
      $region9: #{tpu_custom_call.1} parent=5 // pred_check
        _
      $region10: #{tpu_custom_call.1} parent=5 // pred_check_branch
        %260 = sbr.rel (%p257) target = $region12
      $region11: #{tpu_custom_call.1} parent=5 // pred_region
        %s261 = ssub.s32 %s25, 1
        // Predicated region
        $region13: #{tpu_custom_call.1} parent=11 // pred_check
          %p262 = pneg %p86
        $region14: #{tpu_custom_call.1} parent=11 // pred_check_branch
          %264 = sbr.rel (%p262) target = $region16
        $region15: #{tpu_custom_call.1} parent=11 // pred_region
          _
        $region16: #{tpu_custom_call.1} parent=11 // pred_fallthru
          _
        // Predicated region
        $region17: #{tpu_custom_call.1} parent=11 // pred_check
          %p265 = pneg %p107
        $region18: #{tpu_custom_call.1} parent=11 // pred_check_branch
          %267 = sbr.rel (%p265) target = $region20
        $region19: #{tpu_custom_call.1} parent=11 // pred_region
          _
        $region20: #{tpu_custom_call.1} parent=11 // pred_fallthru
          _
        // Predicated region
        $region21: #{tpu_custom_call.1} parent=11 // pred_check
          %p268 = pneg %p128
        $region22: #{tpu_custom_call.1} parent=11 // pred_check_branch
          %270 = sbr.rel (%p268) target = $region24
        $region23: #{tpu_custom_call.1} parent=11 // pred_region
          %s272 = ssub.s32 256, 256
          %273 = vsyncadd [#allocation6], %s272
          %s274 = sshll.u32 [#allocation5], 4
          %s275 = int_to_ptr.vmem [resolvable:$true] %s274
          %280 = dma.hbm_to_vmem [thread:$0]  %s3, 256, %s275, [#allocation6], 64, 64, 4
        $region24: #{tpu_custom_call.1} parent=11 // pred_fallthru
          _
        // Predicated region
        $region25: #{tpu_custom_call.1} parent=11 // pred_check
          %p281 = pneg %p149
        $region26: #{tpu_custom_call.1} parent=11 // pred_check_branch
          %283 = sbr.rel (%p281) target = $region28
        $region27: #{tpu_custom_call.1} parent=11 // pred_region
          %s285 = ssub.s32 16, 16
          %286 = vsyncadd [#allocation6], %s285
          %s288 = sshll.u32 [#allocation7], 4
          %s289 = int_to_ptr.vmem [resolvable:$true] %s288
          %291 = dma.hbm_to_vmem [thread:$0]  %s4, 16, %s289, [#allocation6]
        $region28: #{tpu_custom_call.1} parent=11 // pred_fallthru
          _
        // Predicated region
        $region29: #{tpu_custom_call.1} parent=11 // pred_check
          %p292 = pneg %p170
        $region30: #{tpu_custom_call.1} parent=11 // pred_check_branch
          %294 = sbr.rel (%p292) target = $region32
        $region31: #{tpu_custom_call.1} parent=11 // pred_region
          _
        $region32: #{tpu_custom_call.1} parent=11 // pred_fallthru
          _
        // Predicated region
        $region33: #{tpu_custom_call.1} parent=11 // pred_check
          %p295 = pneg %p191
        $region34: #{tpu_custom_call.1} parent=11 // pred_check_branch
          %297 = sbr.rel (%p295) target = $region36
        $region35: #{tpu_custom_call.1} parent=11 // pred_region
          _
        $region36: #{tpu_custom_call.1} parent=11 // pred_fallthru
          _
      $region12: #{tpu_custom_call.1} parent=5 // pred_fallthru
        _
      %p298 = scmp.lt.s32.totalorder %s25, 2
      // Predicated region
      $region37: #{tpu_custom_call.1} parent=5 // pred_check
        %p299 = pneg %p298
      $region38: #{tpu_custom_call.1} parent=5 // pred_check_branch
        %301 = sbr.rel (%p299) target = $region40
      $region39: #{tpu_custom_call.1} parent=5 // pred_region
        // Predicated region
        $region41: #{tpu_custom_call.1} parent=39 // pred_check
          %p302 = pneg %p59
        $region42: #{tpu_custom_call.1} parent=39 // pred_check_branch
          %304 = sbr.rel (%p302) target = $region44
        $region43: #{tpu_custom_call.1} parent=39 // pred_region
          %s305 = sand.u32 %s49, 1
          %s306 = scalar_lea.sflag [#allocation3], %s305
          %s307 = sand.u32 %s49, 1
          %s308 = smul.addr %s307, 8
          %s309 = scalar_lea.vmem [#allocation2], %s308
          %s311 = ssub.s32 128, 128
          %312 = vsyncadd %s306, %s311
          %s313 = sadd.s32 %s33, %s32
          %s314 = smul.addr %s313, 128
          %s315 = scalar_lea.hbm %s0, %s314
          %s317 = sshll.u32 %s309, 4
          %s318 = int_to_ptr.vmem [resolvable:$true] %s317
          %320 = dma.hbm_to_vmem [thread:$0]  %s315, 128, %s318, %s306
        $region44: #{tpu_custom_call.1} parent=39 // pred_fallthru
          _
      $region40: #{tpu_custom_call.1} parent=5 // pred_fallthru
        _
      %p321 = scmp.le.s32.totalorder 1, %s25
      %p322 = scmp.lt.s32.totalorder %s25, 3
      %p323 = pnand %p321, %p322
      %p324 = pneg %p323
      // Predicated region
      $region45: #{tpu_custom_call.1} parent=5 // pred_check
        _
      $region46: #{tpu_custom_call.1} parent=5 // pred_check_branch
        %326 = sbr.rel (%p323) target = $region48
      $region47: #{tpu_custom_call.1} parent=5 // pred_region
        %s327 = ssub.s32 %s25, 1
        %s328 = sand.u32 %s52, 1
        %s329 = scalar_lea.sflag [#allocation3], %s328
        %s330 = sand.u32 %s52, 1
        %s331 = smul.addr %s330, 8
        %s332 = scalar_lea.vmem [#allocation2], %s331
        // Predicated region
        $region49: #{tpu_custom_call.1} parent=47 // pred_check
          %p333 = pneg %p65
        $region50: #{tpu_custom_call.1} parent=47 // pred_check_branch
          %335 = sbr.rel (%p333) target = $region52
        $region51: #{tpu_custom_call.1} parent=47 // pred_region
          %336 = dma.done %s329, 128
        $region52: #{tpu_custom_call.1} parent=47 // pred_fallthru
          _
        // Predicated region
        $region53: #{tpu_custom_call.1} parent=47 // pred_check
          %p337 = pneg %p128
        $region54: #{tpu_custom_call.1} parent=47 // pred_check_branch
          %339 = sbr.rel (%p337) target = $region56
        $region55: #{tpu_custom_call.1} parent=47 // pred_region
          %340 = dma.done [#allocation6], 256
        $region56: #{tpu_custom_call.1} parent=47 // pred_fallthru
          _
        // Predicated region
        $region57: #{tpu_custom_call.1} parent=47 // pred_check
          %p341 = pneg %p149
        $region58: #{tpu_custom_call.1} parent=47 // pred_check_branch
          %343 = sbr.rel (%p341) target = $region60
        $region59: #{tpu_custom_call.1} parent=47 // pred_region
          %344 = dma.done [#allocation6], 16
        $region60: #{tpu_custom_call.1} parent=47 // pred_fallthru
          _
        %s345 = sand.u32 %s52, 1
        %s346 = scalar_lea.sflag [#allocation3], %s345
        %s347 = sand.u32 %s52, 1
        %s348 = smul.addr %s347, 8
        %s349 = scalar_lea.vmem [#allocation2], %s348
        %p350 = pneg %p65
        %p351 = pneg %p62
        %p352 = pneg %p86
        %p353 = pneg %p83
        %p354 = pneg %p107
        %p355 = pneg %p104
        %p356 = pneg %p128
        %p357 = pneg %p125
        %p358 = pneg %p149
        %p359 = pneg %p146
        %p360 = pneg %p170
        %p361 = pneg %p167
        %p362 = pneg %p191
        %p363 = pneg %p188
        %p364 = pneg %p219
        %p365 = pneg %p216
        %s366 = sand.u32 %s206, 1
        %s367 = scalar_lea.sflag [#allocation4], %s366
        %s368 = sand.u32 %s206, 1
        %s369 = smul.addr %s368, 4
        %s370 = scalar_lea.vmem [#allocation8], %s369
        %p371 = pneg %p247
        %p372 = pneg %p244
        %s373 = sand.u32 %s234, 1
        %s374 = scalar_lea.sflag [#allocation10], %s373
        %s375 = sand.u32 %s234, 1
        %s376 = smul.addr %s375, 4
        %s377 = scalar_lea.vmem [#allocation9], %s376
        %v379 = vld [vmem:[%s332] sm:$0xff]
        %v380 = vld [vmem:[%s1] sm:$0x1]
        %v381 = vld [vmem:[%s2] sm:$0x1]
        %vm382 = vcmask 261120
        %v383 = vsel %vm382, %v379, 0.0
        %384 = vadd.xlane.f32.xlu0 %v383
        %v385 = vpop.xlane.xlu0 %384
        %v386 = vrcp.pop 32.0
        %v387 = vmul.f32 %v385, %v386
        %v388 = vsub.f32 %v379, %v387
        %v389 = vmul.f32 %v388, %v388
        %v390 = vsel %vm382, %v389, 0.0
        %391 = vadd.xlane.f32.xlu0 %v390
        %v392 = vpop.xlane.xlu0 %391
        %v393 = vmul.f32 %v392, %v386
        %v394 = vadd.f32 %v393, 1e-06
        %v395 = vrsqrt.pop %v394
        %v396 = vmul.f32 %v388, %v395
        %v398 = vlaneseq
        %v399 = vshrl.u32 %v398, 7
        %v400 = vsub.s32 0, %v399
        %v401 = vrot.slane %v380, %v400
        %v403 = vmul.f32 %v396, %v401
        %v405 = vlaneseq
        %v406 = vshrl.u32 %v405, 7
        %v407 = vsub.s32 0, %v406
        %v408 = vrot.slane %v381, %v407
        %v410 = vadd.f32 %v403, %v408
        %v411 = vpack.c.bf16 %v410, %v410
        %v412 = vld [vmem:[#allocation5] sm:$0xf]
        %v413 = vld [vmem:[#allocation5 + $0x4] sm:$0xf]
        %v414 = vld [vmem:[#allocation5 + $0x8] sm:$0xf]
        %v415 = vld [vmem:[#allocation5 + $0xc] sm:$0xf]
        %v416 = vld [vmem:[#allocation7] sm:$0x1]
        %v418 = vlaneseq
        %v419 = vshrl.u32 %v418, 7
        %v420 = vsub.s32 0, %v419
        %v421 = vrot.slane %v416, %v420
        %v427 = vunpack.c.l.b16 %v412
        %v428 = vunpack.c.l.b16 %v413
        %v429 = vunpack.c.l.b16 %v414
        %v430 = vunpack.c.l.b16 %v415
        %v431 = vpack.c.b16 %v428, %v427
        %v432 = vpack.c.b16 %v430, %v429
        %v436 = vsel %vm382, %v411, 0
        %438 = vmatprep.subr.bf16.mxu0 0
        %439 = vmatpush1.bf16.msra.mxu0 %v431
        %440 = vmatprep.subr.bf16.mxu0 0
        %441 = vmatpush1.bf16.msra.mxu0 %v432
        %442 = vmatprep.subr.bf16.mxu0 0
        %443 = vmatpush1.bf16.msra.mxu0 0
        %444 = vmatprep.subr.bf16.mxu0 0
        %445 = vmatpush1.bf16.msra.mxu0 0
        %446 = vmatprep.subr.bf16.mxu0 0
        %447 = vmatpush1.bf16.msra.mxu0 0
        %448 = vmatprep.subr.bf16.mxu0 0
        %449 = vmatpush1.bf16.msra.mxu0 0
        %450 = vmatprep.subr.bf16.mxu0 0
        %451 = vmatpush1.bf16.msra.mxu0 0
        %452 = vmatprep.subr.bf16.mxu0 0
        %453 = vmatpush1.bf16.msra.mxu0 0
        %454 = vmatprep.subr.bf16.mxu0 0
        %455 = vmatpush1.bf16.msra.mxu0 0
        %456 = vmatprep.subr.bf16.mxu0 0
        %457 = vmatpush1.bf16.msra.mxu0 0
        %458 = vmatprep.subr.bf16.mxu0 0
        %459 = vmatpush1.bf16.msra.mxu0 0
        %460 = vmatprep.subr.bf16.mxu0 0
        %461 = vmatpush1.bf16.msra.mxu0 0
        %462 = vmatprep.subr.bf16.mxu0 0
        %463 = vmatpush1.bf16.msra.mxu0 0
        %464 = vmatprep.subr.bf16.mxu0 0
        %465 = vmatpush1.bf16.msra.mxu0 0
        %466 = vmatprep.subr.bf16.mxu0 0
        %467 = vmatpush1.bf16.msra.mxu0 0
        %468 = vmatprep.subr.bf16.mxu0 0
        %469 = vmatpush1.bf16.msra.mxu0 0
        %470 = vmatprep.mubr.bf16.mxu0 0
        %471 = vmatmul.mubr.bf16.gmra.mrb[0].mxu0 %v436
        %v472 = vpop.f32.mrb[0].mxu0
        %v473 = vadd.f32 %v421, %v472
        %v474 = vpop.f32.mrb[0].mxu0
        %v475 = vpop.f32.mrb[0].mxu0
        %v476 = vpop.f32.mrb[0].mxu0
        %477 = vdwg.mxu0
        %v478 = vld [vmem:[%s5] sm:$0xf]
        %v479 = vld [vmem:[%s5 + $0x4] sm:$0xf]
        %v480 = vld [vmem:[%s5 + $0x8] sm:$0xf]
        %v481 = vld [vmem:[%s5 + $0xc] sm:$0xf]
        %v482 = vld [vmem:[%s6] sm:$0x1]
        %v484 = vlaneseq
        %v485 = vshrl.u32 %v484, 7
        %v486 = vsub.s32 0, %v485
        %v487 = vrot.slane %v482, %v486
        %v493 = vunpack.c.l.b16 %v478
        %v494 = vunpack.c.l.b16 %v479
        %v495 = vunpack.c.l.b16 %v480
        %v496 = vunpack.c.l.b16 %v481
        %v497 = vpack.c.b16 %v494, %v493
        %v498 = vpack.c.b16 %v496, %v495
        %501 = vmatprep.subr.bf16.mxu0 0
        %502 = vmatpush1.bf16.msra.mxu0 %v497
        %503 = vmatprep.subr.bf16.mxu0 0
        %504 = vmatpush1.bf16.msra.mxu0 %v498
        %505 = vmatprep.subr.bf16.mxu0 0
        %506 = vmatpush1.bf16.msra.mxu0 0
        %507 = vmatprep.subr.bf16.mxu0 0
        %508 = vmatpush1.bf16.msra.mxu0 0
        %509 = vmatprep.subr.bf16.mxu0 0
        %510 = vmatpush1.bf16.msra.mxu0 0
        %511 = vmatprep.subr.bf16.mxu0 0
        %512 = vmatpush1.bf16.msra.mxu0 0
        %513 = vmatprep.subr.bf16.mxu0 0
        %514 = vmatpush1.bf16.msra.mxu0 0
        %515 = vmatprep.subr.bf16.mxu0 0
        %516 = vmatpush1.bf16.msra.mxu0 0
        %517 = vmatprep.subr.bf16.mxu0 0
        %518 = vmatpush1.bf16.msra.mxu0 0
        %519 = vmatprep.subr.bf16.mxu0 0
        %520 = vmatpush1.bf16.msra.mxu0 0
        %521 = vmatprep.subr.bf16.mxu0 0
        %522 = vmatpush1.bf16.msra.mxu0 0
        %523 = vmatprep.subr.bf16.mxu0 0
        %524 = vmatpush1.bf16.msra.mxu0 0
        %525 = vmatprep.subr.bf16.mxu0 0
        %526 = vmatpush1.bf16.msra.mxu0 0
        %527 = vmatprep.subr.bf16.mxu0 0
        %528 = vmatpush1.bf16.msra.mxu0 0
        %529 = vmatprep.subr.bf16.mxu0 0
        %530 = vmatpush1.bf16.msra.mxu0 0
        %531 = vmatprep.subr.bf16.mxu0 0
        %532 = vmatpush1.bf16.msra.mxu0 0
        %533 = vmatprep.mubr.bf16.mxu0 0
        %534 = vmatmul.mubr.bf16.gmra.mrb[0].mxu0 %v436
        %v535 = vpop.f32.mrb[0].mxu0
        %v536 = vadd.f32 %v487, %v535
        %v537 = vpop.f32.mrb[0].mxu0
        %v538 = vpop.f32.mrb[0].mxu0
        %v539 = vpop.f32.mrb[0].mxu0
        %540 = vdwg.mxu0
        %v541 = vpack.c.bf16 %v473, %v473
        %vm542 = vcmask 257024
        %543 = vst.msk [vmem:[%s370] sm:$0xf] %vm542, %v541
        %v544 = vpack.c.bf16 %v536, %v536
        %545 = vst.msk [vmem:[%s377] sm:$0xf] %vm542, %v544
        %s546 = sand.u32 %s206, 1
        %s547 = scalar_lea.sflag [#allocation4], %s546
        %s548 = sand.u32 %s206, 1
        %s549 = smul.addr %s548, 4
        %s550 = scalar_lea.vmem [#allocation8], %s549
        %s551 = sand.u32 %s234, 1
        %s552 = scalar_lea.sflag [#allocation10], %s551
        %s553 = sand.u32 %s234, 1
        %s554 = smul.addr %s553, 4
        %s555 = scalar_lea.vmem [#allocation9], %s554
        // Predicated region
        $region61: #{tpu_custom_call.1} parent=47 // pred_check
          %p556 = pneg %p216
        $region62: #{tpu_custom_call.1} parent=47 // pred_check_branch
          %558 = sbr.rel (%p556) target = $region64
        $region63: #{tpu_custom_call.1} parent=47 // pred_region
          %s560 = ssub.s32 64, 64
          %561 = vsyncadd %s547, %s560
          %s562 = sadd.s32 %s35, %s34
          %s563 = smul.addr %s562, 64
          %s564 = scalar_lea.hbm %s7, %s563
          %s566 = sshll.u32 %s550, 4
          %s567 = int_to_ptr.vmem [resolvable:$true] %s566
          %569 = dma.vmem_to_hbm [thread:$0]  %s567, 64, %s564, %s547
        $region64: #{tpu_custom_call.1} parent=47 // pred_fallthru
          _
        // Predicated region
        $region65: #{tpu_custom_call.1} parent=47 // pred_check
          %p570 = pneg %p244
        $region66: #{tpu_custom_call.1} parent=47 // pred_check_branch
          %572 = sbr.rel (%p570) target = $region68
        $region67: #{tpu_custom_call.1} parent=47 // pred_region
          %s574 = ssub.s32 64, 64
          %575 = vsyncadd %s552, %s574
          %s576 = sadd.s32 %s35, %s34
          %s577 = smul.addr %s576, 64
          %s578 = scalar_lea.hbm %s8, %s577
          %s580 = sshll.u32 %s555, 4
          %s581 = int_to_ptr.vmem [resolvable:$true] %s580
          %583 = dma.vmem_to_hbm [thread:$0]  %s581, 64, %s578, %s552
        $region68: #{tpu_custom_call.1} parent=47 // pred_fallthru
          _
      $region48: #{tpu_custom_call.1} parent=5 // pred_fallthru
        _
      %p584 = scmp.le.s32.totalorder 2, %s25
      // Predicated region
      $region69: #{tpu_custom_call.1} parent=5 // pred_check
        %p585 = pneg %p584
      $region70: #{tpu_custom_call.1} parent=5 // pred_check_branch
        %587 = sbr.rel (%p585) target = $region72
      $region71: #{tpu_custom_call.1} parent=5 // pred_region
        %s588 = ssub.s32 %s25, 2
        // Predicated region
        $region73: #{tpu_custom_call.1} parent=71 // pred_check
          %p589 = pneg %p222
        $region74: #{tpu_custom_call.1} parent=71 // pred_check_branch
          %591 = sbr.rel (%p589) target = $region76
        $region75: #{tpu_custom_call.1} parent=71 // pred_region
          %s592 = sand.u32 %s207, 1
          %s593 = scalar_lea.sflag [#allocation4], %s592
          %s594 = sand.u32 %s207, 1
          %s595 = smul.addr %s594, 4
          %s596 = scalar_lea.vmem [#allocation8], %s595
          %597 = dma.done %s593, 64
        $region76: #{tpu_custom_call.1} parent=71 // pred_fallthru
          _
        // Predicated region
        $region77: #{tpu_custom_call.1} parent=71 // pred_check
          %p598 = pneg %p250
        $region78: #{tpu_custom_call.1} parent=71 // pred_check_branch
          %600 = sbr.rel (%p598) target = $region80
        $region79: #{tpu_custom_call.1} parent=71 // pred_region
          %s601 = sand.u32 %s235, 1
          %s602 = scalar_lea.sflag [#allocation10], %s601
          %s603 = sand.u32 %s235, 1
          %s604 = smul.addr %s603, 4
          %s605 = scalar_lea.vmem [#allocation9], %s604
          %606 = dma.done %s602, 64
        $region80: #{tpu_custom_call.1} parent=71 // pred_fallthru
          _
      $region72: #{tpu_custom_call.1} parent=5 // pred_fallthru
        _
    $region6: #{tpu_custom_call.1} parent=1 // loop_footer
      %s29 = sadd.s32 1, %s25
    $region7: #{tpu_custom_call.1} parent=1 // loop_footer_branch
      %24 = sbr.rel target = $region3
    $region8: #{tpu_custom_call.1} parent=1 // loop_exit
      _
    %607 = vsyncpa [#allocation3], 1
    %s608 = scalar_lea.sflag [#allocation3], 1
    %609 = vsyncpa %s608, 1
    %610 = vsyncpa [#allocation6], 1
    %611 = vsyncpa [#allocation4], 1
    %s612 = scalar_lea.sflag [#allocation4], 1
    %613 = vsyncpa %s612, 1
    %614 = vsyncpa [#allocation10], 1
    %s615 = scalar_lea.sflag [#allocation10], 1
    %616 = vsyncpa %s615, 1

// kernel: tpu_custom_call.1
$region0: #{tpu_custom_call.1}
  #allocation0 [shape = 'u32[]', space=smem, size = 0x4, offset = 0x4, fixed_abs, tag = 'smem constant byte address 0x4 - core index']
  #allocation1 [shape = 'u32[144,128]{1,0:T(1,128)}', space=vmem, size = 0x12000, scoped, tag = 'internal scratch']
  %s0 = inlined_call_operand.hbm [shape: f32[2,8,32], index: 0, kind: input, shape index: {}]
  %s1 = inlined_call_operand.vmem [shape: f32[1,32], index: 1, kind: input, shape index: {}]
  %s2 = inlined_call_operand.vmem [shape: f32[1,32], index: 2, kind: input, shape index: {}]
  %s3 = inlined_call_operand.hbm [shape: bf16[32,32], index: 3, kind: input, shape index: {}]
  %s4 = inlined_call_operand.hbm [shape: f32[1,32], index: 4, kind: input, shape index: {}]
  %s5 = inlined_call_operand.vmem [shape: bf16[32,32], index: 5, kind: input, shape index: {}]
  %s6 = inlined_call_operand.vmem [shape: f32[1,32], index: 6, kind: input, shape index: {}]
  %s7 = inlined_call_operand.hbm [shape: bf16[2,8,32], index: 7, kind: output, shape index: {0}]
  %s8 = inlined_call_operand.hbm [shape: bf16[2,8,32], index: 8, kind: output, shape index: {1}]
  %9 = xla_tuple %s7, %s8
  %s10 = sld [smem:[#allocation0]]
  $region81: #{tpu_custom_call.1} parent=0
    _
  %s12 = ssub.s32 1, %s10
  %s13 = scalar_select 0, %s12, %s10
  $region1: #{tpu_custom_call.1} parent=0
    #allocation2 [shape = 'u8[8192]{0}', space=vmem, size = 0x2000, scoped, tag = 'input window, operand 0']
    #allocation3 [shape = 's32[2]{0}', space=sflag, size = 0x8, scoped, tag = 'scoped memory for tpu_custom_call.1']
    #allocation4 [shape = 's32[2]{0}', space=sflag, size = 0x8, scoped, tag = 'scoped memory for tpu_custom_call.1']
    #allocation5 [shape = 'u8[8192]{0}', space=vmem, size = 0x2000, scoped, tag = 'input window, operand 3, single buffered']
    #allocation6 [shape = 's32[1]{0}', space=sflag, size = 0x4, scoped, tag = 'scoped memory for tpu_custom_call.1']
    #allocation7 [shape = 'u8[512]{0}', space=vmem, size = 0x400, scoped, tag = 'input window, operand 4, single buffered']
    #allocation8 [shape = 'u8[4096]{0}', space=vmem, size = 0x1000, scoped, tag = 'output window, operand 0']
    #allocation9 [shape = 'u8[4096]{0}', space=vmem, size = 0x1000, scoped, tag = 'output window, operand 1']
    #allocation10 [shape = 's32[2]{0}', space=sflag, size = 0x8, scoped, tag = 'scoped memory for tpu_custom_call.1']
    %14 = vsyncpa [#allocation3], 0
    %s15 = scalar_lea.sflag [#allocation3], 1
    %16 = vsyncpa %s15, 0
    %17 = vsyncpa [#allocation6], 0
    %18 = vsyncpa [#allocation4], 0
    %s19 = scalar_lea.sflag [#allocation4], 1
    %20 = vsyncpa %s19, 0
    %21 = vsyncpa [#allocation10], 0
    %s22 = scalar_lea.sflag [#allocation10], 1
    %23 = vsyncpa %s22, 0
    loop: start=0, step=1, limit=4
    $region2: #{tpu_custom_call.1} parent=1 // loop_pre_header
      _
    $region3: #{tpu_custom_call.1} parent=1 // loop_header
      %s25 = sphi 0, %s29
      %p26 = scmp.ge.s32.totalorder %s25, 4
      %s32 = sphi 0, %s44
      %s33 = sphi 0, %s40
      %s34 = sphi 0, %s32
      %s35 = sphi 0, %s33
      %s36 = sphi 0, %s34
      %s37 = sphi 0, %s35
      %s49 = sphi 0, %s51
      %s52 = sphi 0, %s49
      %s53 = sphi 0, %s52
      %s69 = sphi 0, %s53
      %s73 = sphi 0, %s73
      %s75 = sphi 0, %s73
      %s76 = sphi 0, %s75
      %s90 = sphi 0, %s76
      %s94 = sphi 0, %s94
      %s96 = sphi 0, %s94
      %s97 = sphi 0, %s96
      %s111 = sphi 0, %s97
      %s115 = sphi 0, %s115
      %s117 = sphi 0, %s115
      %s118 = sphi 0, %s117
      %s132 = sphi 0, %s118
      %s136 = sphi 0, %s136
      %s138 = sphi 0, %s136
      %s139 = sphi 0, %s138
      %s153 = sphi 0, %s139
      %s157 = sphi 0, %s157
      %s159 = sphi 0, %s157
      %s160 = sphi 0, %s159
      %s174 = sphi 0, %s160
      %s178 = sphi 0, %s178
      %s180 = sphi 0, %s178
      %s181 = sphi 0, %s180
      %s195 = sphi 0, %s181
      %s203 = sphi 0, %s205
      %s206 = sphi 0, %s203
      %s207 = sphi 0, %s206
      %s223 = sphi 0, %s207
      %s231 = sphi 0, %s233
      %s234 = sphi 0, %s231
      %s235 = sphi 0, %s234
      %s251 = sphi 0, %s235
    $region4: #{tpu_custom_call.1} parent=1 // loop_header_branch
      %28 = sbr.rel (%p26) target = $region8
    $region5: #{tpu_custom_call.1} parent=1 // loop_body
      %s30 = ssub.s32 %s25, 1
      %s31 = ssub.s32 %s25, 2
      %s38 = sadd.s32 1, %s33
      %p39 = scmp.ge.s32.totalorder %s38, 1
      %s40 = scalar_select %p39, 0, %s38
      %s41 = sadd.s32 1, %s32
      %s42 = scalar_select %p39, %s41, %s32
      %p43 = scmp.ge.s32.totalorder %s42, 2
      %s44 = scalar_select %p43, 0, %s42
      %s45 = ssub.s32 %s32, %s44
      %s46 = ssub.s32 %s33, %s40
      %s47 = sor.u32 %s45, %s46
      %p48 = scmp.eq.s32.totalorder %s47, 0
      %s50 = sadd.s32 %s49, 1
      %s51 = scalar_select %p48, %s49, %s50
      %p54 = pneg %p48
      %p55 = scmp.eq.s32.totalorder %s25, 1
      %p56 = por %p54, %p55
      %p57 = scmp.ne.s32.totalorder %s49, %s52
      %p58 = scmp.eq.s32.totalorder %s25, 0
      %p59 = por %p57, %p58
      %p60 = scmp.ne.s32.totalorder %s49, %s52
      %p61 = scmp.eq.s32.totalorder %s30, 1
      %p62 = por %p60, %p61
      %p63 = scmp.ne.s32.totalorder %s52, %s53
      %p64 = scmp.eq.s32.totalorder %s30, 0
      %p65 = por %p63, %p64
      %p66 = scmp.ne.s32.totalorder %s52, %s53
      %p67 = scmp.eq.s32.totalorder %s31, 1
      %p68 = por %p66, %p67
      %p70 = scmp.ne.s32.totalorder %s53, %s69
      %p71 = scmp.eq.s32.totalorder %s31, 0
      %p72 = por %p70, %p71
      %s74 = sadd.s32 %s73, 1
      %p77 = scmp.eq.s32.totalorder %s25, 1
      %p78 = scmp.ne.s32.totalorder %s73, %s75
      %p79 = scmp.eq.s32.totalorder %s25, 0
      %p80 = por %p78, %p79
      %p81 = scmp.ne.s32.totalorder %s73, %s75
      %p82 = scmp.eq.s32.totalorder %s30, 1
      %p83 = por %p81, %p82
      %p84 = scmp.ne.s32.totalorder %s75, %s76
      %p85 = scmp.eq.s32.totalorder %s30, 0
      %p86 = por %p84, %p85
      %p87 = scmp.ne.s32.totalorder %s75, %s76
      %p88 = scmp.eq.s32.totalorder %s31, 1
      %p89 = por %p87, %p88
      %p91 = scmp.ne.s32.totalorder %s76, %s90
      %p92 = scmp.eq.s32.totalorder %s31, 0
      %p93 = por %p91, %p92
      %s95 = sadd.s32 %s94, 1
      %p98 = scmp.eq.s32.totalorder %s25, 1
      %p99 = scmp.ne.s32.totalorder %s94, %s96
      %p100 = scmp.eq.s32.totalorder %s25, 0
      %p101 = por %p99, %p100
      %p102 = scmp.ne.s32.totalorder %s94, %s96
      %p103 = scmp.eq.s32.totalorder %s30, 1
      %p104 = por %p102, %p103
      %p105 = scmp.ne.s32.totalorder %s96, %s97
      %p106 = scmp.eq.s32.totalorder %s30, 0
      %p107 = por %p105, %p106
      %p108 = scmp.ne.s32.totalorder %s96, %s97
      %p109 = scmp.eq.s32.totalorder %s31, 1
      %p110 = por %p108, %p109
      %p112 = scmp.ne.s32.totalorder %s97, %s111
      %p113 = scmp.eq.s32.totalorder %s31, 0
      %p114 = por %p112, %p113
      %s116 = sadd.s32 %s115, 1
      %p119 = scmp.eq.s32.totalorder %s25, 1
      %p120 = scmp.ne.s32.totalorder %s115, %s117
      %p121 = scmp.eq.s32.totalorder %s25, 0
      %p122 = por %p120, %p121
      %p123 = scmp.ne.s32.totalorder %s115, %s117
      %p124 = scmp.eq.s32.totalorder %s30, 1
      %p125 = por %p123, %p124
      %p126 = scmp.ne.s32.totalorder %s117, %s118
      %p127 = scmp.eq.s32.totalorder %s30, 0
      %p128 = por %p126, %p127
      %p129 = scmp.ne.s32.totalorder %s117, %s118
      %p130 = scmp.eq.s32.totalorder %s31, 1
      %p131 = por %p129, %p130
      %p133 = scmp.ne.s32.totalorder %s118, %s132
      %p134 = scmp.eq.s32.totalorder %s31, 0
      %p135 = por %p133, %p134
      %s137 = sadd.s32 %s136, 1
      %p140 = scmp.eq.s32.totalorder %s25, 1
      %p141 = scmp.ne.s32.totalorder %s136, %s138
      %p142 = scmp.eq.s32.totalorder %s25, 0
      %p143 = por %p141, %p142
      %p144 = scmp.ne.s32.totalorder %s136, %s138
      %p145 = scmp.eq.s32.totalorder %s30, 1
      %p146 = por %p144, %p145
      %p147 = scmp.ne.s32.totalorder %s138, %s139
      %p148 = scmp.eq.s32.totalorder %s30, 0
      %p149 = por %p147, %p148
      %p150 = scmp.ne.s32.totalorder %s138, %s139
      %p151 = scmp.eq.s32.totalorder %s31, 1
      %p152 = por %p150, %p151
      %p154 = scmp.ne.s32.totalorder %s139, %s153
      %p155 = scmp.eq.s32.totalorder %s31, 0
      %p156 = por %p154, %p155
      %s158 = sadd.s32 %s157, 1
      %p161 = scmp.eq.s32.totalorder %s25, 1
      %p162 = scmp.ne.s32.totalorder %s157, %s159
      %p163 = scmp.eq.s32.totalorder %s25, 0
      %p164 = por %p162, %p163
      %p165 = scmp.ne.s32.totalorder %s157, %s159
      %p166 = scmp.eq.s32.totalorder %s30, 1
      %p167 = por %p165, %p166
      %p168 = scmp.ne.s32.totalorder %s159, %s160
      %p169 = scmp.eq.s32.totalorder %s30, 0
      %p170 = por %p168, %p169
      %p171 = scmp.ne.s32.totalorder %s159, %s160
      %p172 = scmp.eq.s32.totalorder %s31, 1
      %p173 = por %p171, %p172
      %p175 = scmp.ne.s32.totalorder %s160, %s174
      %p176 = scmp.eq.s32.totalorder %s31, 0
      %p177 = por %p175, %p176
      %s179 = sadd.s32 %s178, 1
      %p182 = scmp.eq.s32.totalorder %s25, 1
      %p183 = scmp.ne.s32.totalorder %s178, %s180
      %p184 = scmp.eq.s32.totalorder %s25, 0
      %p185 = por %p183, %p184
      %p186 = scmp.ne.s32.totalorder %s178, %s180
      %p187 = scmp.eq.s32.totalorder %s30, 1
      %p188 = por %p186, %p187
      %p189 = scmp.ne.s32.totalorder %s180, %s181
      %p190 = scmp.eq.s32.totalorder %s30, 0
      %p191 = por %p189, %p190
      %p192 = scmp.ne.s32.totalorder %s180, %s181
      %p193 = scmp.eq.s32.totalorder %s31, 1
      %p194 = por %p192, %p193
      %p196 = scmp.ne.s32.totalorder %s181, %s195
      %p197 = scmp.eq.s32.totalorder %s31, 0
      %p198 = por %p196, %p197
      %s199 = ssub.s32 %s32, %s44
      %s200 = ssub.s32 %s33, %s40
      %s201 = sor.u32 %s199, %s200
      %p202 = scmp.eq.s32.totalorder %s201, 0
      %s204 = sadd.s32 %s203, 1
      %s205 = scalar_select %p202, %s203, %s204
      %p208 = pneg %p202
      %p209 = scmp.eq.s32.totalorder %s25, 1
      %p210 = por %p208, %p209
      %p211 = scmp.ne.s32.totalorder %s203, %s206
      %p212 = scmp.eq.s32.totalorder %s25, 0
      %p213 = por %p211, %p212
      %p214 = scmp.ne.s32.totalorder %s203, %s206
      %p215 = scmp.eq.s32.totalorder %s30, 1
      %p216 = por %p214, %p215
      %p217 = scmp.ne.s32.totalorder %s206, %s207
      %p218 = scmp.eq.s32.totalorder %s30, 0
      %p219 = por %p217, %p218
      %p220 = scmp.ne.s32.totalorder %s206, %s207
      %p221 = scmp.eq.s32.totalorder %s31, 1
      %p222 = por %p220, %p221
      %p224 = scmp.ne.s32.totalorder %s207, %s223
      %p225 = scmp.eq.s32.totalorder %s31, 0
      %p226 = por %p224, %p225
      %s227 = ssub.s32 %s32, %s44
      %s228 = ssub.s32 %s33, %s40
      %s229 = sor.u32 %s227, %s228
      %p230 = scmp.eq.s32.totalorder %s229, 0
      %s232 = sadd.s32 %s231, 1
      %s233 = scalar_select %p230, %s231, %s232
      %p236 = pneg %p230
      %p237 = scmp.eq.s32.totalorder %s25, 1
      %p238 = por %p236, %p237
      %p239 = scmp.ne.s32.totalorder %s231, %s234
      %p240 = scmp.eq.s32.totalorder %s25, 0
      %p241 = por %p239, %p240
      %p242 = scmp.ne.s32.totalorder %s231, %s234
      %p243 = scmp.eq.s32.totalorder %s30, 1
      %p244 = por %p242, %p243
      %p245 = scmp.ne.s32.totalorder %s234, %s235
      %p246 = scmp.eq.s32.totalorder %s30, 0
      %p247 = por %p245, %p246
      %p248 = scmp.ne.s32.totalorder %s234, %s235
      %p249 = scmp.eq.s32.totalorder %s31, 1
      %p250 = por %p248, %p249
      %p252 = scmp.ne.s32.totalorder %s235, %s251
      %p253 = scmp.eq.s32.totalorder %s31, 0
      %p254 = por %p252, %p253
      %p255 = scmp.le.s32.totalorder 1, %s25
      %p256 = scmp.lt.s32.totalorder %s25, 3
      %p257 = pnand %p255, %p256
      %p258 = pneg %p257
      // Predicated region
      $region9: #{tpu_custom_call.1} parent=5 // pred_check
        _
      $region10: #{tpu_custom_call.1} parent=5 // pred_check_branch
        %260 = sbr.rel (%p257) target = $region12
      $region11: #{tpu_custom_call.1} parent=5 // pred_region
        %s261 = ssub.s32 %s25, 1
        // Predicated region
        $region13: #{tpu_custom_call.1} parent=11 // pred_check
          %p262 = pneg %p86
        $region14: #{tpu_custom_call.1} parent=11 // pred_check_branch
          %264 = sbr.rel (%p262) target = $region16
        $region15: #{tpu_custom_call.1} parent=11 // pred_region
          _
        $region16: #{tpu_custom_call.1} parent=11 // pred_fallthru
          _
        // Predicated region
        $region17: #{tpu_custom_call.1} parent=11 // pred_check
          %p265 = pneg %p107
        $region18: #{tpu_custom_call.1} parent=11 // pred_check_branch
          %267 = sbr.rel (%p265) target = $region20
        $region19: #{tpu_custom_call.1} parent=11 // pred_region
          _
        $region20: #{tpu_custom_call.1} parent=11 // pred_fallthru
          _
        // Predicated region
        $region21: #{tpu_custom_call.1} parent=11 // pred_check
          %p268 = pneg %p128
        $region22: #{tpu_custom_call.1} parent=11 // pred_check_branch
          %270 = sbr.rel (%p268) target = $region24
        $region23: #{tpu_custom_call.1} parent=11 // pred_region
          %s272 = ssub.s32 256, 256
          %273 = vsyncadd [#allocation6], %s272
          %s274 = sshll.u32 [#allocation5], 4
          %s275 = int_to_ptr.vmem [resolvable:$true] %s274
          %280 = dma.hbm_to_vmem [thread:$0]  %s3, 256, %s275, [#allocation6], 64, 64, 4
        $region24: #{tpu_custom_call.1} parent=11 // pred_fallthru
          _
        // Predicated region
        $region25: #{tpu_custom_call.1} parent=11 // pred_check
          %p281 = pneg %p149
        $region26: #{tpu_custom_call.1} parent=11 // pred_check_branch
          %283 = sbr.rel (%p281) target = $region28
        $region27: #{tpu_custom_call.1} parent=11 // pred_region
          %s285 = ssub.s32 16, 16
          %286 = vsyncadd [#allocation6], %s285
          %s288 = sshll.u32 [#allocation7], 4
          %s289 = int_to_ptr.vmem [resolvable:$true] %s288
          %291 = dma.hbm_to_vmem [thread:$0]  %s4, 16, %s289, [#allocation6]
        $region28: #{tpu_custom_call.1} parent=11 // pred_fallthru
          _
        // Predicated region
        $region29: #{tpu_custom_call.1} parent=11 // pred_check
          %p292 = pneg %p170
        $region30: #{tpu_custom_call.1} parent=11 // pred_check_branch
          %294 = sbr.rel (%p292) target = $region32
        $region31: #{tpu_custom_call.1} parent=11 // pred_region
          _
        $region32: #{tpu_custom_call.1} parent=11 // pred_fallthru
          _
        // Predicated region
        $region33: #{tpu_custom_call.1} parent=11 // pred_check
          %p295 = pneg %p191
        $region34: #{tpu_custom_call.1} parent=11 // pred_check_branch
          %297 = sbr.rel (%p295) target = $region36
        $region35: #{tpu_custom_call.1} parent=11 // pred_region
          _
        $region36: #{tpu_custom_call.1} parent=11 // pred_fallthru
          _
      $region12: #{tpu_custom_call.1} parent=5 // pred_fallthru
        _
      %p298 = scmp.lt.s32.totalorder %s25, 2
      // Predicated region
      $region37: #{tpu_custom_call.1} parent=5 // pred_check
        %p299 = pneg %p298
      $region38: #{tpu_custom_call.1} parent=5 // pred_check_branch
        %301 = sbr.rel (%p299) target = $region40
      $region39: #{tpu_custom_call.1} parent=5 // pred_region
        // Predicated region
        $region41: #{tpu_custom_call.1} parent=39 // pred_check
          %p302 = pneg %p59
        $region42: #{tpu_custom_call.1} parent=39 // pred_check_branch
          %304 = sbr.rel (%p302) target = $region44
        $region43: #{tpu_custom_call.1} parent=39 // pred_region
          %s305 = sand.u32 %s49, 1
          %s306 = scalar_lea.sflag [#allocation3], %s305
          %s307 = sand.u32 %s49, 1
          %s308 = smul.addr %s307, 8
          %s309 = scalar_lea.vmem [#allocation2], %s308
          %s311 = ssub.s32 128, 128
          %312 = vsyncadd %s306, %s311
          %s313 = sadd.s32 %s33, %s32
          %s314 = smul.addr %s313, 128
          %s315 = scalar_lea.hbm %s0, %s314
          %s317 = sshll.u32 %s309, 4
          %s318 = int_to_ptr.vmem [resolvable:$true] %s317
          %320 = dma.hbm_to_vmem [thread:$0]  %s315, 128, %s318, %s306
        $region44: #{tpu_custom_call.1} parent=39 // pred_fallthru
          _
      $region40: #{tpu_custom_call.1} parent=5 // pred_fallthru
        _
      %p321 = scmp.le.s32.totalorder 1, %s25
      %p322 = scmp.lt.s32.totalorder %s25, 3
      %p323 = pnand %p321, %p322
      %p324 = pneg %p323
      // Predicated region
      $region45: #{tpu_custom_call.1} parent=5 // pred_check
        _
      $region46: #{tpu_custom_call.1} parent=5 // pred_check_branch
        %326 = sbr.rel (%p323) target = $region48
      $region47: #{tpu_custom_call.1} parent=5 // pred_region
        %s327 = ssub.s32 %s25, 1
        %s328 = sand.u32 %s52, 1
        %s329 = scalar_lea.sflag [#allocation3], %s328
        %s330 = sand.u32 %s52, 1
        %s331 = smul.addr %s330, 8
        %s332 = scalar_lea.vmem [#allocation2], %s331
        // Predicated region
        $region49: #{tpu_custom_call.1} parent=47 // pred_check
          %p333 = pneg %p65
        $region50: #{tpu_custom_call.1} parent=47 // pred_check_branch
          %335 = sbr.rel (%p333) target = $region52
        $region51: #{tpu_custom_call.1} parent=47 // pred_region
          %336 = dma.done %s329, 128
        $region52: #{tpu_custom_call.1} parent=47 // pred_fallthru
          _
        // Predicated region
        $region53: #{tpu_custom_call.1} parent=47 // pred_check
          %p337 = pneg %p128
        $region54: #{tpu_custom_call.1} parent=47 // pred_check_branch
          %339 = sbr.rel (%p337) target = $region56
        $region55: #{tpu_custom_call.1} parent=47 // pred_region
          %340 = dma.done [#allocation6], 256
        $region56: #{tpu_custom_call.1} parent=47 // pred_fallthru
          _
        // Predicated region
        $region57: #{tpu_custom_call.1} parent=47 // pred_check
          %p341 = pneg %p149
        $region58: #{tpu_custom_call.1} parent=47 // pred_check_branch
          %343 = sbr.rel (%p341) target = $region60
        $region59: #{tpu_custom_call.1} parent=47 // pred_region
          %344 = dma.done [#allocation6], 16
        $region60: #{tpu_custom_call.1} parent=47 // pred_fallthru
          _
        %s345 = sand.u32 %s52, 1
        %s346 = scalar_lea.sflag [#allocation3], %s345
        %s347 = sand.u32 %s52, 1
        %s348 = smul.addr %s347, 8
        %s349 = scalar_lea.vmem [#allocation2], %s348
        %p350 = pneg %p65
        %p351 = pneg %p62
        %p352 = pneg %p86
        %p353 = pneg %p83
        %p354 = pneg %p107
        %p355 = pneg %p104
        %p356 = pneg %p128
        %p357 = pneg %p125
        %p358 = pneg %p149
        %p359 = pneg %p146
        %p360 = pneg %p170
        %p361 = pneg %p167
        %p362 = pneg %p191
        %p363 = pneg %p188
        %p364 = pneg %p219
        %p365 = pneg %p216
        %s366 = sand.u32 %s206, 1
        %s367 = scalar_lea.sflag [#allocation4], %s366
        %s368 = sand.u32 %s206, 1
        %s369 = smul.addr %s368, 4
        %s370 = scalar_lea.vmem [#allocation8], %s369
        %p371 = pneg %p247
        %p372 = pneg %p244
        %s373 = sand.u32 %s234, 1
        %s374 = scalar_lea.sflag [#allocation10], %s373
        %s375 = sand.u32 %s234, 1
        %s376 = smul.addr %s375, 4
        %s377 = scalar_lea.vmem [#allocation9], %s376
        %v379 = vld [vmem:[%s332] sm:$0xff]
        %v380 = vld [vmem:[%s1] sm:$0x1]
        %v381 = vld [vmem:[%s2] sm:$0x1]
        %vm382 = vcmask 261120
        %v383 = vsel %vm382, %v379, 0.0
        %384 = vadd.xlane.f32.xlu0 %v383
        %v385 = vpop.xlane.xlu0 %384
        %v386 = vrcp.pop 32.0
        %v387 = vmul.f32 %v385, %v386
        %v388 = vsub.f32 %v379, %v387
        %v389 = vmul.f32 %v388, %v388
        %v390 = vsel %vm382, %v389, 0.0
        %391 = vadd.xlane.f32.xlu0 %v390
        %v392 = vpop.xlane.xlu0 %391
        %v393 = vmul.f32 %v392, %v386
        %v394 = vadd.f32 %v393, 1e-06
        %v395 = vrsqrt.pop %v394
        %v396 = vmul.f32 %v388, %v395
        %v398 = vlaneseq
        %v399 = vshrl.u32 %v398, 7
        %v400 = vsub.s32 0, %v399
        %v401 = vrot.slane %v380, %v400
        %v403 = vmul.f32 %v396, %v401
        %v405 = vlaneseq
        %v406 = vshrl.u32 %v405, 7
        %v407 = vsub.s32 0, %v406
        %v408 = vrot.slane %v381, %v407
        %v410 = vadd.f32 %v403, %v408
        %v411 = vpack.c.bf16 %v410, %v410
        %v412 = vld [vmem:[#allocation5] sm:$0xf]
        %v413 = vld [vmem:[#allocation5 + $0x4] sm:$0xf]
        %v414 = vld [vmem:[#allocation5 + $0x8] sm:$0xf]
        %v415 = vld [vmem:[#allocation5 + $0xc] sm:$0xf]
        %v416 = vld [vmem:[#allocation7] sm:$0x1]
        %v418 = vlaneseq
        %v419 = vshrl.u32 %v418, 7
        %v420 = vsub.s32 0, %v419
        %v421 = vrot.slane %v416, %v420
        %v427 = vunpack.c.l.b16 %v412
        %v428 = vunpack.c.l.b16 %v413
        %v429 = vunpack.c.l.b16 %v414
        %v430 = vunpack.c.l.b16 %v415
        %v431 = vpack.c.b16 %v428, %v427
        %v432 = vpack.c.b16 %v430, %v429
        %v436 = vsel %vm382, %v411, 0
        %438 = vmatprep.subr.bf16.mxu0 0
        %439 = vmatpush1.bf16.msra.mxu0 %v431
        %440 = vmatprep.subr.bf16.mxu0 0
        %441 = vmatpush1.bf16.msra.mxu0 %v432
        %442 = vmatprep.subr.bf16.mxu0 0
        %443 = vmatpush1.bf16.msra.mxu0 0
        %444 = vmatprep.subr.bf16.mxu0 0
        %445 = vmatpush1.bf16.msra.mxu0 0
        %446 = vmatprep.subr.bf16.mxu0 0
        %447 = vmatpush1.bf16.msra.mxu0 0
        %448 = vmatprep.subr.bf16.mxu0 0
        %449 = vmatpush1.bf16.msra.mxu0 0
        %450 = vmatprep.subr.bf16.mxu0 0
        %451 = vmatpush1.bf16.msra.mxu0 0
        %452 = vmatprep.subr.bf16.mxu0 0
        %453 = vmatpush1.bf16.msra.mxu0 0
        %454 = vmatprep.subr.bf16.mxu0 0
        %455 = vmatpush1.bf16.msra.mxu0 0
        %456 = vmatprep.subr.bf16.mxu0 0
        %457 = vmatpush1.bf16.msra.mxu0 0
        %458 = vmatprep.subr.bf16.mxu0 0
        %459 = vmatpush1.bf16.msra.mxu0 0
        %460 = vmatprep.subr.bf16.mxu0 0
        %461 = vmatpush1.bf16.msra.mxu0 0
        %462 = vmatprep.subr.bf16.mxu0 0
        %463 = vmatpush1.bf16.msra.mxu0 0
        %464 = vmatprep.subr.bf16.mxu0 0
        %465 = vmatpush1.bf16.msra.mxu0 0
        %466 = vmatprep.subr.bf16.mxu0 0
        %467 = vmatpush1.bf16.msra.mxu0 0
        %468 = vmatprep.subr.bf16.mxu0 0
        %469 = vmatpush1.bf16.msra.mxu0 0
        %470 = vmatprep.mubr.bf16.mxu0 0
        %471 = vmatmul.mubr.bf16.gmra.mrb[0].mxu0 %v436
        %v472 = vpop.f32.mrb[0].mxu0
        %v473 = vadd.f32 %v421, %v472
        %v474 = vpop.f32.mrb[0].mxu0
        %v475 = vpop.f32.mrb[0].mxu0
        %v476 = vpop.f32.mrb[0].mxu0
        %477 = vdwg.mxu0
        %v478 = vld [vmem:[%s5] sm:$0xf]
        %v479 = vld [vmem:[%s5 + $0x4] sm:$0xf]
        %v480 = vld [vmem:[%s5 + $0x8] sm:$0xf]
        %v481 = vld [vmem:[%s5 + $0xc] sm:$0xf]
        %v482 = vld [vmem:[%s6] sm:$0x1]
        %v484 = vlaneseq
        %v485 = vshrl.u32 %v484, 7
        %v486 = vsub.s32 0, %v485
        %v487 = vrot.slane %v482, %v486
        %v493 = vunpack.c.l.b16 %v478
        %v494 = vunpack.c.l.b16 %v479
        %v495 = vunpack.c.l.b16 %v480
        %v496 = vunpack.c.l.b16 %v481
        %v497 = vpack.c.b16 %v494, %v493
        %v498 = vpack.c.b16 %v496, %v495
        %501 = vmatprep.subr.bf16.mxu0 0
        %502 = vmatpush1.bf16.msra.mxu0 %v497
        %503 = vmatprep.subr.bf16.mxu0 0
        %504 = vmatpush1.bf16.msra.mxu0 %v498
        %505 = vmatprep.subr.bf16.mxu0 0
        %506 = vmatpush1.bf16.msra.mxu0 0
        %507 = vmatprep.subr.bf16.mxu0 0
        %508 = vmatpush1.bf16.msra.mxu0 0
        %509 = vmatprep.subr.bf16.mxu0 0
        %510 = vmatpush1.bf16.msra.mxu0 0
        %511 = vmatprep.subr.bf16.mxu0 0
        %512 = vmatpush1.bf16.msra.mxu0 0
        %513 = vmatprep.subr.bf16.mxu0 0
        %514 = vmatpush1.bf16.msra.mxu0 0
        %515 = vmatprep.subr.bf16.mxu0 0
        %516 = vmatpush1.bf16.msra.mxu0 0
        %517 = vmatprep.subr.bf16.mxu0 0
        %518 = vmatpush1.bf16.msra.mxu0 0
        %519 = vmatprep.subr.bf16.mxu0 0
        %520 = vmatpush1.bf16.msra.mxu0 0
        %521 = vmatprep.subr.bf16.mxu0 0
        %522 = vmatpush1.bf16.msra.mxu0 0
        %523 = vmatprep.subr.bf16.mxu0 0
        %524 = vmatpush1.bf16.msra.mxu0 0
        %525 = vmatprep.subr.bf16.mxu0 0
        %526 = vmatpush1.bf16.msra.mxu0 0
        %527 = vmatprep.subr.bf16.mxu0 0
        %528 = vmatpush1.bf16.msra.mxu0 0
        %529 = vmatprep.subr.bf16.mxu0 0
        %530 = vmatpush1.bf16.msra.mxu0 0
        %531 = vmatprep.subr.bf16.mxu0 0
        %532 = vmatpush1.bf16.msra.mxu0 0
        %533 = vmatprep.mubr.bf16.mxu0 0
        %534 = vmatmul.mubr.bf16.gmra.mrb[0].mxu0 %v436
        %v535 = vpop.f32.mrb[0].mxu0
        %v536 = vadd.f32 %v487, %v535
        %v537 = vpop.f32.mrb[0].mxu0
        %v538 = vpop.f32.mrb[0].mxu0
        %v539 = vpop.f32.mrb[0].mxu0
        %540 = vdwg.mxu0
        %v541 = vpack.c.bf16 %v473, %v473
        %vm542 = vcmask 257024
        %543 = vst.msk [vmem:[%s370] sm:$0xf] %vm542, %v541
        %v544 = vpack.c.bf16 %v536, %v536
        %545 = vst.msk [vmem:[%s377] sm:$0xf] %vm542, %v544
        %s546 = sand.u32 %s206, 1
        %s547 = scalar_lea.sflag [#allocation4], %s546
        %s548 = sand.u32 %s206, 1
        %s549 = smul.addr %s548, 4
        %s550 = scalar_lea.vmem [#allocation8], %s549
        %s551 = sand.u32 %s234, 1
        %s552 = scalar_lea.sflag [#allocation10], %s551
        %s553 = sand.u32 %s234, 1
        %s554 = smul.addr %s553, 4
        %s555 = scalar_lea.vmem [#allocation9], %s554
        // Predicated region
        $region61: #{tpu_custom_call.1} parent=47 // pred_check
          %p556 = pneg %p216
        $region62: #{tpu_custom_call.1} parent=47 // pred_check_branch
          %558 = sbr.rel (%p556) target = $region64
        $region63: #{tpu_custom_call.1} parent=47 // pred_region
          %s560 = ssub.s32 64, 64
          %561 = vsyncadd %s547, %s560
          %s562 = sadd.s32 %s35, %s34
          %s563 = smul.addr %s562, 64
          %s564 = scalar_lea.hbm %s7, %s563
          %s566 = sshll.u32 %s550, 4
          %s567 = int_to_ptr.vmem [resolvable:$true] %s566
          %569 = dma.vmem_to_hbm [thread:$0]  %s567, 64, %s564, %s547
        $region64: #{tpu_custom_call.1} parent=47 // pred_fallthru
          _
        // Predicated region
        $region65: #{tpu_custom_call.1} parent=47 // pred_check
          %p570 = pneg %p244
        $region66: #{tpu_custom_call.1} parent=47 // pred_check_branch
          %572 = sbr.rel (%p570) target = $region68
        $region67: #{tpu_custom_call.1} parent=47 // pred_region
          %s574 = ssub.s32 64, 64
          %575 = vsyncadd %s552, %s574
          %s576 = sadd.s32 %s35, %s34
          %s577 = smul.addr %s576, 64
          %s578 = scalar_lea.hbm %s8, %s577
          %s580 = sshll.u32 %s555, 4
          %s581 = int_to_ptr.vmem [resolvable:$true] %s580
          %583 = dma.vmem_to_hbm [thread:$0]  %s581, 64, %s578, %s552
        $region68: #{tpu_custom_call.1} parent=47 // pred_fallthru
          _
      $region48: #{tpu_custom_call.1} parent=5 // pred_fallthru
        _
      %p584 = scmp.le.s32.totalorder 2, %s25
      // Predicated region
      $region69: #{tpu_custom_call.1} parent=5 // pred_check
        %p585 = pneg %p584
      $region70: #{tpu_custom_call.1} parent=5 // pred_check_branch
        %587 = sbr.rel (%p585) target = $region72
      $region71: #{tpu_custom_call.1} parent=5 // pred_region
        %s588 = ssub.s32 %s25, 2
        // Predicated region
        $region73: #{tpu_custom_call.1} parent=71 // pred_check
          %p589 = pneg %p222
        $region74: #{tpu_custom_call.1} parent=71 // pred_check_branch
          %591 = sbr.rel (%p589) target = $region76
        $region75: #{tpu_custom_call.1} parent=71 // pred_region
          %s592 = sand.u32 %s207, 1
          %s593 = scalar_lea.sflag [#allocation4], %s592
          %s594 = sand.u32 %s207, 1
          %s595 = smul.addr %s594, 4
          %s596 = scalar_lea.vmem [#allocation8], %s595
          %597 = dma.done %s593, 64
        $region76: #{tpu_custom_call.1} parent=71 // pred_fallthru
          _
        // Predicated region
        $region77: #{tpu_custom_call.1} parent=71 // pred_check
          %p598 = pneg %p250
        $region78: #{tpu_custom_call.1} parent=71 // pred_check_branch
          %600 = sbr.rel (%p598) target = $region80
        $region79: #{tpu_custom_call.1} parent=71 // pred_region
          %s601 = sand.u32 %s235, 1
          %s602 = scalar_lea.sflag [#allocation10], %s601
          %s603 = sand.u32 %s235, 1
          %s604 = smul.addr %s603, 4
          %s605 = scalar_lea.vmem [#allocation9], %s604
          %606 = dma.done %s602, 64
        $region80: #{tpu_custom_call.1} parent=71 // pred_fallthru
          _
      $region72: #{tpu_custom_call.1} parent=5 // pred_fallthru
        _
    $region6: #{tpu_custom_call.1} parent=1 // loop_footer
      %s29 = sadd.s32 1, %s25
    $region7: #{tpu_custom_call.1} parent=1 // loop_footer_branch
      %24 = sbr.rel target = $region3
    $region8: #{tpu_custom_call.1} parent=1 // loop_exit
      _
    %607 = vsyncpa [#allocation3], 1
    %s608 = scalar_lea.sflag [#allocation3], 1
    %609 = vsyncpa %s608, 1
    %610 = vsyncpa [#allocation6], 1
    %611 = vsyncpa [#allocation4], 1
    %s612 = scalar_lea.sflag [#allocation4], 1
    %613 = vsyncpa %s612, 1
    %614 = vsyncpa [#allocation10], 1
    %s615 = scalar_lea.sflag [#allocation10], 1
    %616 = vsyncpa %s615, 1

</llo_original>
